<compile_context>
chip_gen: v7x
topology: tpu7x:2x2x1
jax: 0.10.0
libtpu: 0.0.40
codegen_flags: <defaults>
</compile_context>

<pallas_src>
import math

import jax
import jax.numpy as jnp
import numpy as np
from jax.experimental import pallas as pl
from jax.experimental.pallas import tpu as pltpu

# Model hyper-parameters (n_head * v_size MUST equal embedding_dim, as the
# reference module's `q_k_v + inputs` residual implicitly requires).
VOC_SIZE = 64
EMB_DIM = 32
SEQ_LEN = 8
QK_SIZE = 8
V_SIZE = 8
N_HEAD = 4
MLP_SIZE = 64
LN_EPS = 1e-5  # torch.nn.LayerNorm default

# Packed-layout constants.
Q_OUT = N_HEAD * QK_SIZE          # 32
V_OUT = N_HEAD * V_SIZE           # 32
QKV_OUT = 2 * Q_OUT + V_OUT       # 96
VOC_PAD = 128                     # lane-dense logits / output width
W_ROWS, W_COLS = 64, 128          # every weight zero-padded into a (64,128) slab
N_WSLABS = 4 * 2 + 1              # per block: wqkv, wp, w1, w2 ; plus wl
N_PROWS = 8 * 2 + 3               # per block: g1,be1,bqkv,bp,g2,be2,b1,b2 ; +gf,bf,bl
NEG_BIG = -1.0e30                 # pad-column logit bias (masks them out of softmax)


# ---------------------------------------------------------------------------
# math helpers
# ---------------------------------------------------------------------------
def _layernorm(x, g, b):
    # var = E[x^2] - E[x]^2 : the two reductions are independent (shorter
    # critical path than mean -> (x-mean)^2 -> mean).  Biased, like torch.
    mean = jnp.mean(x, axis=-1, keepdims=True)
    meansq = jnp.mean(x * x, axis=-1, keepdims=True)
    var = meansq - mean * mean
    return (x - mean) * jax.lax.rsqrt(var + LN_EPS) * g + b


def _layernorm_ref(x, g, b):  # two-pass form for the pure-JAX reference
    mean = jnp.mean(x, axis=-1, keepdims=True)
    var = jnp.mean((x - mean) ** 2, axis=-1, keepdims=True)
    return (x - mean) * jax.lax.rsqrt(var + LN_EPS) * g + b


def _softmax_exact(x):
    m = jnp.max(x, axis=-1, keepdims=True)
    e = jnp.exp(x - m)
    return e / jnp.sum(e, axis=-1, keepdims=True)


def _softmax_attn(x):  # in-kernel attention softmax: reciprocal on the EUP slot
    m = jnp.max(x, axis=-1, keepdims=True)
    e = jnp.exp(x - m)
    s = jnp.sum(e, axis=-1, keepdims=True)
    return e * pl.reciprocal(s, approx=True)


# ---------------------------------------------------------------------------
# Pallas kernel: whole forward pass, weights read lazily from packed slabs
# ---------------------------------------------------------------------------
def _block(x, w_ref, p_ref, wb, pb):
    """One Transformer block. wb/pb are static slab offsets. x is (8, 32)."""
    # --- Attention (LayerNorm -> fused QKV -> masked softmax -> proj) ---
    n = _layernorm(x, p_ref[pb + 0, :, :EMB_DIM], p_ref[pb + 1, :, :EMB_DIM])

    # Full 128-lane matmul against the zero-padded slab; slice q/k/v after.
    qkv = jnp.dot(n, w_ref[wb + 0, :EMB_DIM, :],
                  preferred_element_type=jnp.float32) + p_ref[pb + 2]   # (8,128)
    q = qkv[:, :Q_OUT]                  # 1/sqrt(q_k_size) pre-folded into wq/bq
    k = qkv[:, Q_OUT:2 * Q_OUT]
    v = qkv[:, 2 * Q_OUT:2 * Q_OUT + V_OUT]

    # q @ k^T without materializing a transpose.
    scores = jax.lax.dot_general(q, k, (((1,), (1,)), ((), ())),
                                 preferred_element_type=jnp.float32)    # (8,8)
    row = jax.lax.broadcasted_iota(jnp.int32, (SEQ_LEN, SEQ_LEN), 0)
    col = jax.lax.broadcasted_iota(jnp.int32, (SEQ_LEN, SEQ_LEN), 1)
    # Replicates the reference exactly: masked_fill_(tril_mask, -1e9), i.e. the
    # LOWER triangle *including the diagonal* is set to -1e9, then softmax.
    scores = jnp.where(col <= row, jnp.float32(-1000000000.0), scores)
    probs = _softmax_attn(scores)

    att = jnp.dot(probs, v, preferred_element_type=jnp.float32) + n     # + norm_output
    proj = jnp.dot(att, w_ref[wb + 1, :EMB_DIM, :],
                   preferred_element_type=jnp.float32) + p_ref[pb + 3]  # (8,128)
    x = proj[:, :EMB_DIM] + x           # residual around Attention

    # --- MLP ---
    n2 = _layernorm(x, p_ref[pb + 4, :, :EMB_DIM], p_ref[pb + 5, :, :EMB_DIM])
    h = jnp.maximum(
        jnp.dot(n2, w_ref[wb + 2, :EMB_DIM, :],
                preferred_element_type=jnp.float32) + p_ref[pb + 6],
        0.0)                                                            # (8,128)
    o = jnp.dot(h[:, :MLP_SIZE], w_ref[wb + 3, :MLP_SIZE, :],
                preferred_element_type=jnp.float32) + p_ref[pb + 7]     # (8,128)
    return o[:, :EMB_DIM] + x           # residual around MLP


def nanogpt_kernel(ids_ref, wt_ref, pos_ref, w_ref, p_ref, out_ref):
    # Token-embedding gather inside the kernel: one vectorized compare builds
    # the (8,64) one-hot, then a single MXU matmul against the word table.
    col = jax.lax.broadcasted_iota(jnp.int32, (SEQ_LEN, VOC_SIZE), 1)
    onehot = (col == ids_ref[...]).astype(jnp.float32)                  # (8,64)
    x = jnp.dot(onehot, wt_ref[...], preferred_element_type=jnp.float32) + pos_ref[...]

    x = _block(x, w_ref, p_ref, wb=0, pb=0)      # tf1
    x = _block(x, w_ref, p_ref, wb=4, pb=8)      # tf2

    n = _layernorm(x, p_ref[16, :, :EMB_DIM], p_ref[17, :, :EMB_DIM])
    # Lane-dense (8,128) logits.  Pad columns of the bias row are -1e30 (set at
    # pack time), so the padded lanes vanish in the softmax with no in-kernel
    # masking.  Final softmax uses an exact divide so rows sum to 1.
    logits = jnp.dot(n, w_ref[8, :EMB_DIM, :],
                     preferred_element_type=jnp.float32) + p_ref[18]
    out_ref[...] = _softmax_exact(logits)


@jax.jit
def nanogpt_forward(token_ids_2d, word_table, pos_table, w_slab, p_slab):
    probs_padded = pl.pallas_call(
        nanogpt_kernel,
        out_shape=jax.ShapeDtypeStruct((SEQ_LEN, VOC_PAD), jnp.float32),
        in_specs=[
            pl.BlockSpec(memory_space=pltpu.MemorySpace.VMEM),   # token ids (8,1)
            pl.BlockSpec(memory_space=pltpu.MemorySpace.VMEM),   # word table
            pl.BlockSpec(memory_space=pltpu.MemorySpace.VMEM),   # pos table
            pl.BlockSpec(memory_space=pltpu.MemorySpace.VMEM),   # weight slab
            pl.BlockSpec(memory_space=pltpu.MemorySpace.VMEM),   # bias / LN slab
        ],
        out_specs=pl.BlockSpec(memory_space=pltpu.MemorySpace.VMEM),
    )(token_ids_2d, word_table, pos_table, w_slab, p_slab)
    return probs_padded[:, :VOC_SIZE]


# ---------------------------------------------------------------------------
# one-time host-side packing of the 36 raw params into 2 lane-dense slabs
# ---------------------------------------------------------------------------
def pack_params(flat_params):
    fp = [np.asarray(p, np.float32) for p in flat_params]
    inv = np.float32(1.0 / math.sqrt(QK_SIZE))
    w_slab = np.zeros((N_WSLABS, W_ROWS, W_COLS), np.float32)
    # Param rows pre-broadcast across the 8 sublanes -> plain full-vreg loads.
    p_slab = np.zeros((N_PROWS, SEQ_LEN, W_COLS), np.float32)

    def put_w(s, w):
        w_slab[s, :w.shape[0], :w.shape[1]] = w

    def put_p(r, b, fill=0.0):
        b = np.reshape(b, (-1,)).astype(np.float32)
        row = np.full((W_COLS,), fill, np.float32)
        row[:b.shape[0]] = b
        p_slab[r] = np.broadcast_to(row, (SEQ_LEN, W_COLS))

    for b in range(2):
        (g1, be1, wq, bq, wk, bk, wv, bv, wp, bp,
         g2, be2, w1, b1, w2, b2) = fp[16 * b:16 * (b + 1)]
        put_w(4 * b + 0, np.concatenate([wq * inv, wk, wv], axis=1))  # fused QKV
        put_w(4 * b + 1, wp)
        put_w(4 * b + 2, w1)
        put_w(4 * b + 3, w2)
        put_p(8 * b + 0, g1)
        put_p(8 * b + 1, be1)
        put_p(8 * b + 2, np.concatenate([bq * inv, bk, bv], axis=1))
        put_p(8 * b + 3, bp)
        put_p(8 * b + 4, g2)
        put_p(8 * b + 5, be2)
        put_p(8 * b + 6, b1)
        put_p(8 * b + 7, b2)
    gf, bf, wl, bl = fp[32:36]
    put_w(8, wl)
    put_p(16, gf)
    put_p(17, bf)
    put_p(18, bl, fill=NEG_BIG)   # pad logit columns masked at pack time
    return jnp.asarray(w_slab), jnp.asarray(p_slab)


# ---------------------------------------------------------------------------
# pure-JAX reference (same math, original unpacked params) for correctness
# ---------------------------------------------------------------------------
def _transformer_ref(x, p):
    (g1, be1, wq, bq, wk, bk, wv, bv, wp, bp,
     g2, be2, w1, b1, w2, b2) = p
    n = _layernorm_ref(x, g1, be1)
    q = jnp.dot(n, wq, preferred_element_type=jnp.float32) + bq
    k = jnp.dot(n, wk, preferred_element_type=jnp.float32) + bk
    v = jnp.dot(n, wv, preferred_element_type=jnp.float32) + bv
    scores = jnp.dot(q, k.T, preferred_element_type=jnp.float32) / math.sqrt(QK_SIZE)
    s = scores.shape[0]
    row = jax.lax.broadcasted_iota(jnp.int32, (s, s), 0)
    col = jax.lax.broadcasted_iota(jnp.int32, (s, s), 1)
    scores = jnp.where(col <= row, jnp.float32(-1000000000.0), scores)
    probs = _softmax_exact(scores)
    att = jnp.dot(probs, v, preferred_element_type=jnp.float32) + n
    proj = jnp.dot(att, wp, preferred_element_type=jnp.float32) + bp
    x = proj + x
    n2 = _layernorm_ref(x, g2, be2)
    h = jnp.maximum(jnp.dot(n2, w1, preferred_element_type=jnp.float32) + b1, 0.0)
    o = jnp.dot(h, w2, preferred_element_type=jnp.float32) + b2
    return o + x


def nanogpt_ref(token_ids, word_table, pos_table, flat_params):
    x = jnp.take(word_table, token_ids, axis=0) + pos_table
    x = _transformer_ref(x, flat_params[0:16])
    x = _transformer_ref(x, flat_params[16:32])
    n = _layernorm_ref(x, flat_params[32], flat_params[33])
    logits = jnp.dot(n, flat_params[34], preferred_element_type=jnp.float32) + flat_params[35]
    return _softmax_exact(logits)


# ---------------------------------------------------------------------------
# deterministic parameter init (shapes follow the module's __init__)
# ---------------------------------------------------------------------------
def make_params(key):
    ks = iter(jax.random.split(key, 32))

    def lin(in_f, out_f):
        w = (jax.random.normal(next(ks), (in_f, out_f)) / math.sqrt(in_f)).astype(jnp.float32)
        b = (0.02 * jax.random.normal(next(ks), (1, out_f))).astype(jnp.float32)
        return w, b

    def ln():
        return (jnp.ones((1, EMB_DIM), jnp.float32),
                jnp.zeros((1, EMB_DIM), jnp.float32))

    word_table = (0.02 * jax.random.normal(next(ks), (VOC_SIZE, EMB_DIM))).astype(jnp.float32)
    pos_table = (0.02 * jax.random.normal(next(ks), (SEQ_LEN, EMB_DIM))).astype(jnp.float32)

    flat = []
    for _ in range(2):  # tf1, tf2
        g1, be1 = ln()
        wq, bq = lin(EMB_DIM, N_HEAD * QK_SIZE)
        wk, bk = lin(EMB_DIM, N_HEAD * QK_SIZE)
        wv, bv = lin(EMB_DIM, N_HEAD * V_SIZE)
        wp, bp = lin(N_HEAD * V_SIZE, EMB_DIM)
        g2, be2 = ln()
        w1, b1 = lin(EMB_DIM, MLP_SIZE)
        w2, b2 = lin(MLP_SIZE, EMB_DIM)
        flat += [g1, be1, wq, bq, wk, bk, wv, bv, wp, bp, g2, be2, w1, b1, w2, b2]

    gf, bf = ln()
    wl, bl = lin(EMB_DIM, VOC_SIZE)
    flat += [gf, bf, wl, bl]
    return word_table, pos_table, flat


if __name__ == "__main__":
    key = jax.random.PRNGKey(0)
    k_tok, k_par = jax.random.split(key)
    word_table, pos_table, flat_params = make_params(k_par)
    token_ids = jax.random.randint(k_tok, (SEQ_LEN,), 0, VOC_SIZE, dtype=jnp.int32)

    # Pack once on the host; the jitted forward sees only 5 lane-dense operands.
    w_slab, p_slab = pack_params(flat_params)
    token_ids_2d = token_ids.reshape(SEQ_LEN, 1)

    out = nanogpt_forward(token_ids_2d, word_table, pos_table, w_slab, p_slab)
    out = jax.block_until_ready(out)

    ref = nanogpt_ref(token_ids, word_table, pos_table, flat_params)
    assert out.shape == (SEQ_LEN, VOC_SIZE)
    # Attention softmaxes use the EUP approx reciprocal -> 1e-3-class tolerance.
    assert np.allclose(np.asarray(out), np.asarray(ref), atol=2e-3, rtol=2e-3)
    # Final softmax uses an exact divide, so rows sum to 1 to float rounding.
    assert np.allclose(np.asarray(out).sum(-1), 1.0, atol=1e-3)
    print("KERNEL_OK")
</pallas_src>

<mosaic_0001>
module attributes {stable_mosaic.version = 11 : i64} {
  func.func @nanogpt_kernel(%arg0: memref<8x1xi32, #tpu.memory_space<vmem>>, %arg1: memref<64x32xf32, #tpu.memory_space<vmem>>, %arg2: memref<8x32xf32, #tpu.memory_space<vmem>>, %arg3: memref<9x64x128xf32, #tpu.memory_space<vmem>>, %arg4: memref<19x8x128xf32, #tpu.memory_space<vmem>>, %arg5: memref<8x128xf32, #tpu.memory_space<vmem>>) attributes {dimension_semantics = [], scalar_prefetch = 0 : i64, scratch_operands = 0 : i64, tpu.core_type = #tpu.core_type<tc>} {
    %0 = tpu.iota {dimensions = array<i32: 1>} : vector<8x64xi32>
    %c0 = arith.constant 0 : index
    %c0_0 = arith.constant 0 : index
    %1 = vector.load %arg0[%c0, %c0_0] : memref<8x1xi32, #tpu.memory_space<vmem>>, vector<8x1xi32>
    %2 = vector.broadcast %1 : vector<8x1xi32> to vector<8x64xi32>
    %3 = arith.cmpi eq, %0, %2 : vector<8x64xi32>
    %4 = arith.extui %3 : vector<8x64xi1> to vector<8x64xi32>
    %5 = arith.sitofp %4 : vector<8x64xi32> to vector<8x64xf32>
    %c0_1 = arith.constant 0 : index
    %c0_2 = arith.constant 0 : index
    %6 = vector.load %arg1[%c0_1, %c0_2] : memref<64x32xf32, #tpu.memory_space<vmem>>, vector<64x32xf32>
    %cst = arith.constant dense<0.000000e+00> : vector<8x32xf32>
    %7 = tpu.matmul %5, %6, %cst {dimension_numbers = #tpu.dot_dimension_numbers<[1], [0], [0], [1], [0, 0, 1, 1], [], []>} : vector<8x64xf32>, vector<64x32xf32>, vector<8x32xf32> -> vector<8x32xf32>
    %c0_3 = arith.constant 0 : index
    %c0_4 = arith.constant 0 : index
    %8 = vector.load %arg2[%c0_3, %c0_4] : memref<8x32xf32, #tpu.memory_space<vmem>>, vector<8x32xf32>
    %9 = arith.addf %7, %8 : vector<8x32xf32>
    %c0_5 = arith.constant 0 : index
    %c0_6 = arith.constant 0 : index
    %c0_7 = arith.constant 0 : index
    %10 = vector.load %arg4[%c0_5, %c0_6, %c0_7] : memref<19x8x128xf32, #tpu.memory_space<vmem>>, vector<1x8x32xf32>
    %11 = vector.shape_cast %10 : vector<1x8x32xf32> to vector<8x32xf32>
    %c1 = arith.constant 1 : index
    %c0_8 = arith.constant 0 : index
    %c0_9 = arith.constant 0 : index
    %12 = vector.load %arg4[%c1, %c0_8, %c0_9] : memref<19x8x128xf32, #tpu.memory_space<vmem>>, vector<1x8x32xf32>
    %13 = vector.shape_cast %12 : vector<1x8x32xf32> to vector<8x32xf32>
    %cst_10 = arith.constant dense<0.000000e+00> : vector<8xf32>
    %14 = vector.multi_reduction <add>, %9, %cst_10 [1] : vector<8x32xf32> to vector<8xf32>
    %15 = vector.shape_cast %14 : vector<8xf32> to vector<8x1xf32>
    %cst_11 = arith.constant 3.200000e+01 : f32
    %16 = vector.broadcast %cst_11 : f32 to vector<8x1xf32>
    %17 = arith.divf %15, %16 : vector<8x1xf32>
    %18 = arith.mulf %9, %9 : vector<8x32xf32>
    %cst_12 = arith.constant dense<0.000000e+00> : vector<8xf32>
    %19 = vector.multi_reduction <add>, %18, %cst_12 [1] : vector<8x32xf32> to vector<8xf32>
    %20 = vector.shape_cast %19 : vector<8xf32> to vector<8x1xf32>
    %cst_13 = arith.constant 3.200000e+01 : f32
    %21 = vector.broadcast %cst_13 : f32 to vector<8x1xf32>
    %22 = arith.divf %20, %21 : vector<8x1xf32>
    %23 = arith.mulf %17, %17 : vector<8x1xf32>
    %24 = arith.subf %22, %23 : vector<8x1xf32>
    %25 = vector.broadcast %17 : vector<8x1xf32> to vector<8x32xf32>
    %26 = arith.subf %9, %25 : vector<8x32xf32>
    %cst_14 = arith.constant 9.99999974E-6 : f32
    %27 = vector.broadcast %cst_14 : f32 to vector<8x1xf32>
    %28 = arith.addf %24, %27 : vector<8x1xf32>
    %29 = math.rsqrt %28 : vector<8x1xf32>
    %30 = vector.broadcast %29 : vector<8x1xf32> to vector<8x32xf32>
    %31 = arith.mulf %26, %30 : vector<8x32xf32>
    %32 = arith.mulf %31, %11 : vector<8x32xf32>
    %33 = arith.addf %32, %13 : vector<8x32xf32>
    %c0_15 = arith.constant 0 : index
    %c0_16 = arith.constant 0 : index
    %c0_17 = arith.constant 0 : index
    %34 = vector.load %arg3[%c0_15, %c0_16, %c0_17] : memref<9x64x128xf32, #tpu.memory_space<vmem>>, vector<1x32x128xf32>
    %35 = vector.shape_cast %34 : vector<1x32x128xf32> to vector<32x128xf32>
    %cst_18 = arith.constant dense<0.000000e+00> : vector<8x128xf32>
    %36 = tpu.matmul %33, %35, %cst_18 {dimension_numbers = #tpu.dot_dimension_numbers<[1], [0], [0], [1], [0, 0, 1, 1], [], []>} : vector<8x32xf32>, vector<32x128xf32>, vector<8x128xf32> -> vector<8x128xf32>
    %c2 = arith.constant 2 : index
    %c0_19 = arith.constant 0 : index
    %c0_20 = arith.constant 0 : index
    %37 = vector.load %arg4[%c2, %c0_19, %c0_20] : memref<19x8x128xf32, #tpu.memory_space<vmem>>, vector<1x8x128xf32>
    %38 = vector.shape_cast %37 : vector<1x8x128xf32> to vector<8x128xf32>
    %39 = arith.addf %36, %38 : vector<8x128xf32>
    %40 = vector.extract_strided_slice %39 {offsets = [0, 0], sizes = [8, 32], strides = [1, 1]} : vector<8x128xf32> to vector<8x32xf32>
    %41 = vector.extract_strided_slice %39 {offsets = [0, 32], sizes = [8, 32], strides = [1, 1]} : vector<8x128xf32> to vector<8x32xf32>
    %42 = vector.extract_strided_slice %39 {offsets = [0, 64], sizes = [8, 32], strides = [1, 1]} : vector<8x128xf32> to vector<8x32xf32>
    %cst_21 = arith.constant dense<0.000000e+00> : vector<8x8xf32>
    %43 = tpu.matmul %40, %41, %cst_21 {dimension_numbers = #tpu.dot_dimension_numbers<[1], [1], [0], [0], [0, 0, 1, 0], [], []>} : vector<8x32xf32>, vector<8x32xf32>, vector<8x8xf32> -> vector<8x8xf32>
    %44 = tpu.iota {dimensions = array<i32: 0>} : vector<8x8xi32>
    %45 = tpu.iota {dimensions = array<i32: 1>} : vector<8x8xi32>
    %46 = arith.cmpi sle, %45, %44 : vector<8x8xi32>
    %cst_22 = arith.constant -1.000000e+09 : f32
    %47 = vector.broadcast %cst_22 : f32 to vector<8x8xf32>
    %48 = arith.select %46, %47, %43 : vector<8x8xi1>, vector<8x8xf32>
    %cst_23 = arith.constant dense<0xFF800000> : vector<8xf32>
    %49 = vector.multi_reduction <maximumf>, %48, %cst_23 [1] : vector<8x8xf32> to vector<8xf32>
    %50 = vector.shape_cast %49 : vector<8xf32> to vector<8x1xf32>
    %51 = vector.broadcast %50 : vector<8x1xf32> to vector<8x8xf32>
    %52 = arith.subf %48, %51 : vector<8x8xf32>
    %53 = math.exp %52 : vector<8x8xf32>
    %cst_24 = arith.constant dense<0.000000e+00> : vector<8xf32>
    %54 = vector.multi_reduction <add>, %53, %cst_24 [1] : vector<8x8xf32> to vector<8xf32>
    %55 = vector.shape_cast %54 : vector<8xf32> to vector<8x1xf32>
    %56 = tpu.reciprocal %55 {approx = true} : vector<8x1xf32> -> vector<8x1xf32>
    %57 = vector.broadcast %56 : vector<8x1xf32> to vector<8x8xf32>
    %58 = arith.mulf %53, %57 : vector<8x8xf32>
    %cst_25 = arith.constant dense<0.000000e+00> : vector<8x32xf32>
    %59 = tpu.matmul %58, %42, %cst_25 {dimension_numbers = #tpu.dot_dimension_numbers<[1], [0], [0], [1], [0, 0, 1, 1], [], []>} : vector<8x8xf32>, vector<8x32xf32>, vector<8x32xf32> -> vector<8x32xf32>
    %60 = arith.addf %59, %33 : vector<8x32xf32>
    %c1_26 = arith.constant 1 : index
    %c0_27 = arith.constant 0 : index
    %c0_28 = arith.constant 0 : index
    %61 = vector.load %arg3[%c1_26, %c0_27, %c0_28] : memref<9x64x128xf32, #tpu.memory_space<vmem>>, vector<1x32x128xf32>
    %62 = vector.shape_cast %61 : vector<1x32x128xf32> to vector<32x128xf32>
    %cst_29 = arith.constant dense<0.000000e+00> : vector<8x128xf32>
    %63 = tpu.matmul %60, %62, %cst_29 {dimension_numbers = #tpu.dot_dimension_numbers<[1], [0], [0], [1], [0, 0, 1, 1], [], []>} : vector<8x32xf32>, vector<32x128xf32>, vector<8x128xf32> -> vector<8x128xf32>
    %c3 = arith.constant 3 : index
    %c0_30 = arith.constant 0 : index
    %c0_31 = arith.constant 0 : index
    %64 = vector.load %arg4[%c3, %c0_30, %c0_31] : memref<19x8x128xf32, #tpu.memory_space<vmem>>, vector<1x8x128xf32>
    %65 = vector.shape_cast %64 : vector<1x8x128xf32> to vector<8x128xf32>
    %66 = arith.addf %63, %65 : vector<8x128xf32>
    %67 = vector.extract_strided_slice %66 {offsets = [0, 0], sizes = [8, 32], strides = [1, 1]} : vector<8x128xf32> to vector<8x32xf32>
    %68 = arith.addf %67, %9 : vector<8x32xf32>
    %c4 = arith.constant 4 : index
    %c0_32 = arith.constant 0 : index
    %c0_33 = arith.constant 0 : index
    %69 = vector.load %arg4[%c4, %c0_32, %c0_33] : memref<19x8x128xf32, #tpu.memory_space<vmem>>, vector<1x8x32xf32>
    %70 = vector.shape_cast %69 : vector<1x8x32xf32> to vector<8x32xf32>
    %c5 = arith.constant 5 : index
    %c0_34 = arith.constant 0 : index
    %c0_35 = arith.constant 0 : index
    %71 = vector.load %arg4[%c5, %c0_34, %c0_35] : memref<19x8x128xf32, #tpu.memory_space<vmem>>, vector<1x8x32xf32>
    %72 = vector.shape_cast %71 : vector<1x8x32xf32> to vector<8x32xf32>
    %cst_36 = arith.constant dense<0.000000e+00> : vector<8xf32>
    %73 = vector.multi_reduction <add>, %68, %cst_36 [1] : vector<8x32xf32> to vector<8xf32>
    %74 = vector.shape_cast %73 : vector<8xf32> to vector<8x1xf32>
    %cst_37 = arith.constant 3.200000e+01 : f32
    %75 = vector.broadcast %cst_37 : f32 to vector<8x1xf32>
    %76 = arith.divf %74, %75 : vector<8x1xf32>
    %77 = arith.mulf %68, %68 : vector<8x32xf32>
    %cst_38 = arith.constant dense<0.000000e+00> : vector<8xf32>
    %78 = vector.multi_reduction <add>, %77, %cst_38 [1] : vector<8x32xf32> to vector<8xf32>
    %79 = vector.shape_cast %78 : vector<8xf32> to vector<8x1xf32>
    %cst_39 = arith.constant 3.200000e+01 : f32
    %80 = vector.broadcast %cst_39 : f32 to vector<8x1xf32>
    %81 = arith.divf %79, %80 : vector<8x1xf32>
    %82 = arith.mulf %76, %76 : vector<8x1xf32>
    %83 = arith.subf %81, %82 : vector<8x1xf32>
    %84 = vector.broadcast %76 : vector<8x1xf32> to vector<8x32xf32>
    %85 = arith.subf %68, %84 : vector<8x32xf32>
    %cst_40 = arith.constant 9.99999974E-6 : f32
    %86 = vector.broadcast %cst_40 : f32 to vector<8x1xf32>
    %87 = arith.addf %83, %86 : vector<8x1xf32>
    %88 = math.rsqrt %87 : vector<8x1xf32>
    %89 = vector.broadcast %88 : vector<8x1xf32> to vector<8x32xf32>
    %90 = arith.mulf %85, %89 : vector<8x32xf32>
    %91 = arith.mulf %90, %70 : vector<8x32xf32>
    %92 = arith.addf %91, %72 : vector<8x32xf32>
    %c2_41 = arith.constant 2 : index
    %c0_42 = arith.constant 0 : index
    %c0_43 = arith.constant 0 : index
    %93 = vector.load %arg3[%c2_41, %c0_42, %c0_43] : memref<9x64x128xf32, #tpu.memory_space<vmem>>, vector<1x32x128xf32>
    %94 = vector.shape_cast %93 : vector<1x32x128xf32> to vector<32x128xf32>
    %cst_44 = arith.constant dense<0.000000e+00> : vector<8x128xf32>
    %95 = tpu.matmul %92, %94, %cst_44 {dimension_numbers = #tpu.dot_dimension_numbers<[1], [0], [0], [1], [0, 0, 1, 1], [], []>} : vector<8x32xf32>, vector<32x128xf32>, vector<8x128xf32> -> vector<8x128xf32>
    %c6 = arith.constant 6 : index
    %c0_45 = arith.constant 0 : index
    %c0_46 = arith.constant 0 : index
    %96 = vector.load %arg4[%c6, %c0_45, %c0_46] : memref<19x8x128xf32, #tpu.memory_space<vmem>>, vector<1x8x128xf32>
    %97 = vector.shape_cast %96 : vector<1x8x128xf32> to vector<8x128xf32>
    %98 = arith.addf %95, %97 : vector<8x128xf32>
    %cst_47 = arith.constant 0.000000e+00 : f32
    %99 = vector.broadcast %cst_47 : f32 to vector<8x128xf32>
    %100 = arith.maximumf %98, %99 : vector<8x128xf32>
    %101 = vector.extract_strided_slice %100 {offsets = [0, 0], sizes = [8, 64], strides = [1, 1]} : vector<8x128xf32> to vector<8x64xf32>
    %c3_48 = arith.constant 3 : index
    %c0_49 = arith.constant 0 : index
    %c0_50 = arith.constant 0 : index
    %102 = vector.load %arg3[%c3_48, %c0_49, %c0_50] : memref<9x64x128xf32, #tpu.memory_space<vmem>>, vector<1x64x128xf32>
    %103 = vector.shape_cast %102 : vector<1x64x128xf32> to vector<64x128xf32>
    %cst_51 = arith.constant dense<0.000000e+00> : vector<8x128xf32>
    %104 = tpu.matmul %101, %103, %cst_51 {dimension_numbers = #tpu.dot_dimension_numbers<[1], [0], [0], [1], [0, 0, 1, 1], [], []>} : vector<8x64xf32>, vector<64x128xf32>, vector<8x128xf32> -> vector<8x128xf32>
    %c7 = arith.constant 7 : index
    %c0_52 = arith.constant 0 : index
    %c0_53 = arith.constant 0 : index
    %105 = vector.load %arg4[%c7, %c0_52, %c0_53] : memref<19x8x128xf32, #tpu.memory_space<vmem>>, vector<1x8x128xf32>
    %106 = vector.shape_cast %105 : vector<1x8x128xf32> to vector<8x128xf32>
    %107 = arith.addf %104, %106 : vector<8x128xf32>
    %108 = vector.extract_strided_slice %107 {offsets = [0, 0], sizes = [8, 32], strides = [1, 1]} : vector<8x128xf32> to vector<8x32xf32>
    %109 = arith.addf %108, %68 : vector<8x32xf32>
    %c8 = arith.constant 8 : index
    %c0_54 = arith.constant 0 : index
    %c0_55 = arith.constant 0 : index
    %110 = vector.load %arg4[%c8, %c0_54, %c0_55] : memref<19x8x128xf32, #tpu.memory_space<vmem>>, vector<1x8x32xf32>
    %111 = vector.shape_cast %110 : vector<1x8x32xf32> to vector<8x32xf32>
    %c9 = arith.constant 9 : index
    %c0_56 = arith.constant 0 : index
    %c0_57 = arith.constant 0 : index
    %112 = vector.load %arg4[%c9, %c0_56, %c0_57] : memref<19x8x128xf32, #tpu.memory_space<vmem>>, vector<1x8x32xf32>
    %113 = vector.shape_cast %112 : vector<1x8x32xf32> to vector<8x32xf32>
    %cst_58 = arith.constant dense<0.000000e+00> : vector<8xf32>
    %114 = vector.multi_reduction <add>, %109, %cst_58 [1] : vector<8x32xf32> to vector<8xf32>
    %115 = vector.shape_cast %114 : vector<8xf32> to vector<8x1xf32>
    %cst_59 = arith.constant 3.200000e+01 : f32
    %116 = vector.broadcast %cst_59 : f32 to vector<8x1xf32>
    %117 = arith.divf %115, %116 : vector<8x1xf32>
    %118 = arith.mulf %109, %109 : vector<8x32xf32>
    %cst_60 = arith.constant dense<0.000000e+00> : vector<8xf32>
    %119 = vector.multi_reduction <add>, %118, %cst_60 [1] : vector<8x32xf32> to vector<8xf32>
    %120 = vector.shape_cast %119 : vector<8xf32> to vector<8x1xf32>
    %cst_61 = arith.constant 3.200000e+01 : f32
    %121 = vector.broadcast %cst_61 : f32 to vector<8x1xf32>
    %122 = arith.divf %120, %121 : vector<8x1xf32>
    %123 = arith.mulf %117, %117 : vector<8x1xf32>
    %124 = arith.subf %122, %123 : vector<8x1xf32>
    %125 = vector.broadcast %117 : vector<8x1xf32> to vector<8x32xf32>
    %126 = arith.subf %109, %125 : vector<8x32xf32>
    %cst_62 = arith.constant 9.99999974E-6 : f32
    %127 = vector.broadcast %cst_62 : f32 to vector<8x1xf32>
    %128 = arith.addf %124, %127 : vector<8x1xf32>
    %129 = math.rsqrt %128 : vector<8x1xf32>
    %130 = vector.broadcast %129 : vector<8x1xf32> to vector<8x32xf32>
    %131 = arith.mulf %126, %130 : vector<8x32xf32>
    %132 = arith.mulf %131, %111 : vector<8x32xf32>
    %133 = arith.addf %132, %113 : vector<8x32xf32>
    %c4_63 = arith.constant 4 : index
    %c0_64 = arith.constant 0 : index
    %c0_65 = arith.constant 0 : index
    %134 = vector.load %arg3[%c4_63, %c0_64, %c0_65] : memref<9x64x128xf32, #tpu.memory_space<vmem>>, vector<1x32x128xf32>
    %135 = vector.shape_cast %134 : vector<1x32x128xf32> to vector<32x128xf32>
    %cst_66 = arith.constant dense<0.000000e+00> : vector<8x128xf32>
    %136 = tpu.matmul %133, %135, %cst_66 {dimension_numbers = #tpu.dot_dimension_numbers<[1], [0], [0], [1], [0, 0, 1, 1], [], []>} : vector<8x32xf32>, vector<32x128xf32>, vector<8x128xf32> -> vector<8x128xf32>
    %c10 = arith.constant 10 : index
    %c0_67 = arith.constant 0 : index
    %c0_68 = arith.constant 0 : index
    %137 = vector.load %arg4[%c10, %c0_67, %c0_68] : memref<19x8x128xf32, #tpu.memory_space<vmem>>, vector<1x8x128xf32>
    %138 = vector.shape_cast %137 : vector<1x8x128xf32> to vector<8x128xf32>
    %139 = arith.addf %136, %138 : vector<8x128xf32>
    %140 = vector.extract_strided_slice %139 {offsets = [0, 0], sizes = [8, 32], strides = [1, 1]} : vector<8x128xf32> to vector<8x32xf32>
    %141 = vector.extract_strided_slice %139 {offsets = [0, 32], sizes = [8, 32], strides = [1, 1]} : vector<8x128xf32> to vector<8x32xf32>
    %142 = vector.extract_strided_slice %139 {offsets = [0, 64], sizes = [8, 32], strides = [1, 1]} : vector<8x128xf32> to vector<8x32xf32>
    %cst_69 = arith.constant dense<0.000000e+00> : vector<8x8xf32>
    %143 = tpu.matmul %140, %141, %cst_69 {dimension_numbers = #tpu.dot_dimension_numbers<[1], [1], [0], [0], [0, 0, 1, 0], [], []>} : vector<8x32xf32>, vector<8x32xf32>, vector<8x8xf32> -> vector<8x8xf32>
    %144 = tpu.iota {dimensions = array<i32: 0>} : vector<8x8xi32>
    %145 = tpu.iota {dimensions = array<i32: 1>} : vector<8x8xi32>
    %146 = arith.cmpi sle, %145, %144 : vector<8x8xi32>
    %cst_70 = arith.constant -1.000000e+09 : f32
    %147 = vector.broadcast %cst_70 : f32 to vector<8x8xf32>
    %148 = arith.select %146, %147, %143 : vector<8x8xi1>, vector<8x8xf32>
    %cst_71 = arith.constant dense<0xFF800000> : vector<8xf32>
    %149 = vector.multi_reduction <maximumf>, %148, %cst_71 [1] : vector<8x8xf32> to vector<8xf32>
    %150 = vector.shape_cast %149 : vector<8xf32> to vector<8x1xf32>
    %151 = vector.broadcast %150 : vector<8x1xf32> to vector<8x8xf32>
    %152 = arith.subf %148, %151 : vector<8x8xf32>
    %153 = math.exp %152 : vector<8x8xf32>
    %cst_72 = arith.constant dense<0.000000e+00> : vector<8xf32>
    %154 = vector.multi_reduction <add>, %153, %cst_72 [1] : vector<8x8xf32> to vector<8xf32>
    %155 = vector.shape_cast %154 : vector<8xf32> to vector<8x1xf32>
    %156 = tpu.reciprocal %155 {approx = true} : vector<8x1xf32> -> vector<8x1xf32>
    %157 = vector.broadcast %156 : vector<8x1xf32> to vector<8x8xf32>
    %158 = arith.mulf %153, %157 : vector<8x8xf32>
    %cst_73 = arith.constant dense<0.000000e+00> : vector<8x32xf32>
    %159 = tpu.matmul %158, %142, %cst_73 {dimension_numbers = #tpu.dot_dimension_numbers<[1], [0], [0], [1], [0, 0, 1, 1], [], []>} : vector<8x8xf32>, vector<8x32xf32>, vector<8x32xf32> -> vector<8x32xf32>
    %160 = arith.addf %159, %133 : vector<8x32xf32>
    %c5_74 = arith.constant 5 : index
    %c0_75 = arith.constant 0 : index
    %c0_76 = arith.constant 0 : index
    %161 = vector.load %arg3[%c5_74, %c0_75, %c0_76] : memref<9x64x128xf32, #tpu.memory_space<vmem>>, vector<1x32x128xf32>
    %162 = vector.shape_cast %161 : vector<1x32x128xf32> to vector<32x128xf32>
    %cst_77 = arith.constant dense<0.000000e+00> : vector<8x128xf32>
    %163 = tpu.matmul %160, %162, %cst_77 {dimension_numbers = #tpu.dot_dimension_numbers<[1], [0], [0], [1], [0, 0, 1, 1], [], []>} : vector<8x32xf32>, vector<32x128xf32>, vector<8x128xf32> -> vector<8x128xf32>
    %c11 = arith.constant 11 : index
    %c0_78 = arith.constant 0 : index
    %c0_79 = arith.constant 0 : index
    %164 = vector.load %arg4[%c11, %c0_78, %c0_79] : memref<19x8x128xf32, #tpu.memory_space<vmem>>, vector<1x8x128xf32>
    %165 = vector.shape_cast %164 : vector<1x8x128xf32> to vector<8x128xf32>
    %166 = arith.addf %163, %165 : vector<8x128xf32>
    %167 = vector.extract_strided_slice %166 {offsets = [0, 0], sizes = [8, 32], strides = [1, 1]} : vector<8x128xf32> to vector<8x32xf32>
    %168 = arith.addf %167, %109 : vector<8x32xf32>
    %c12 = arith.constant 12 : index
    %c0_80 = arith.constant 0 : index
    %c0_81 = arith.constant 0 : index
    %169 = vector.load %arg4[%c12, %c0_80, %c0_81] : memref<19x8x128xf32, #tpu.memory_space<vmem>>, vector<1x8x32xf32>
    %170 = vector.shape_cast %169 : vector<1x8x32xf32> to vector<8x32xf32>
    %c13 = arith.constant 13 : index
    %c0_82 = arith.constant 0 : index
    %c0_83 = arith.constant 0 : index
    %171 = vector.load %arg4[%c13, %c0_82, %c0_83] : memref<19x8x128xf32, #tpu.memory_space<vmem>>, vector<1x8x32xf32>
    %172 = vector.shape_cast %171 : vector<1x8x32xf32> to vector<8x32xf32>
    %cst_84 = arith.constant dense<0.000000e+00> : vector<8xf32>
    %173 = vector.multi_reduction <add>, %168, %cst_84 [1] : vector<8x32xf32> to vector<8xf32>
    %174 = vector.shape_cast %173 : vector<8xf32> to vector<8x1xf32>
    %cst_85 = arith.constant 3.200000e+01 : f32
    %175 = vector.broadcast %cst_85 : f32 to vector<8x1xf32>
    %176 = arith.divf %174, %175 : vector<8x1xf32>
    %177 = arith.mulf %168, %168 : vector<8x32xf32>
    %cst_86 = arith.constant dense<0.000000e+00> : vector<8xf32>
    %178 = vector.multi_reduction <add>, %177, %cst_86 [1] : vector<8x32xf32> to vector<8xf32>
    %179 = vector.shape_cast %178 : vector<8xf32> to vector<8x1xf32>
    %cst_87 = arith.constant 3.200000e+01 : f32
    %180 = vector.broadcast %cst_87 : f32 to vector<8x1xf32>
    %181 = arith.divf %179, %180 : vector<8x1xf32>
    %182 = arith.mulf %176, %176 : vector<8x1xf32>
    %183 = arith.subf %181, %182 : vector<8x1xf32>
    %184 = vector.broadcast %176 : vector<8x1xf32> to vector<8x32xf32>
    %185 = arith.subf %168, %184 : vector<8x32xf32>
    %cst_88 = arith.constant 9.99999974E-6 : f32
    %186 = vector.broadcast %cst_88 : f32 to vector<8x1xf32>
    %187 = arith.addf %183, %186 : vector<8x1xf32>
    %188 = math.rsqrt %187 : vector<8x1xf32>
    %189 = vector.broadcast %188 : vector<8x1xf32> to vector<8x32xf32>
    %190 = arith.mulf %185, %189 : vector<8x32xf32>
    %191 = arith.mulf %190, %170 : vector<8x32xf32>
    %192 = arith.addf %191, %172 : vector<8x32xf32>
    %c6_89 = arith.constant 6 : index
    %c0_90 = arith.constant 0 : index
    %c0_91 = arith.constant 0 : index
    %193 = vector.load %arg3[%c6_89, %c0_90, %c0_91] : memref<9x64x128xf32, #tpu.memory_space<vmem>>, vector<1x32x128xf32>
    %194 = vector.shape_cast %193 : vector<1x32x128xf32> to vector<32x128xf32>
    %cst_92 = arith.constant dense<0.000000e+00> : vector<8x128xf32>
    %195 = tpu.matmul %192, %194, %cst_92 {dimension_numbers = #tpu.dot_dimension_numbers<[1], [0], [0], [1], [0, 0, 1, 1], [], []>} : vector<8x32xf32>, vector<32x128xf32>, vector<8x128xf32> -> vector<8x128xf32>
    %c14 = arith.constant 14 : index
    %c0_93 = arith.constant 0 : index
    %c0_94 = arith.constant 0 : index
    %196 = vector.load %arg4[%c14, %c0_93, %c0_94] : memref<19x8x128xf32, #tpu.memory_space<vmem>>, vector<1x8x128xf32>
    %197 = vector.shape_cast %196 : vector<1x8x128xf32> to vector<8x128xf32>
    %198 = arith.addf %195, %197 : vector<8x128xf32>
    %cst_95 = arith.constant 0.000000e+00 : f32
    %199 = vector.broadcast %cst_95 : f32 to vector<8x128xf32>
    %200 = arith.maximumf %198, %199 : vector<8x128xf32>
    %201 = vector.extract_strided_slice %200 {offsets = [0, 0], sizes = [8, 64], strides = [1, 1]} : vector<8x128xf32> to vector<8x64xf32>
    %c7_96 = arith.constant 7 : index
    %c0_97 = arith.constant 0 : index
    %c0_98 = arith.constant 0 : index
    %202 = vector.load %arg3[%c7_96, %c0_97, %c0_98] : memref<9x64x128xf32, #tpu.memory_space<vmem>>, vector<1x64x128xf32>
    %203 = vector.shape_cast %202 : vector<1x64x128xf32> to vector<64x128xf32>
    %cst_99 = arith.constant dense<0.000000e+00> : vector<8x128xf32>
    %204 = tpu.matmul %201, %203, %cst_99 {dimension_numbers = #tpu.dot_dimension_numbers<[1], [0], [0], [1], [0, 0, 1, 1], [], []>} : vector<8x64xf32>, vector<64x128xf32>, vector<8x128xf32> -> vector<8x128xf32>
    %c15 = arith.constant 15 : index
    %c0_100 = arith.constant 0 : index
    %c0_101 = arith.constant 0 : index
    %205 = vector.load %arg4[%c15, %c0_100, %c0_101] : memref<19x8x128xf32, #tpu.memory_space<vmem>>, vector<1x8x128xf32>
    %206 = vector.shape_cast %205 : vector<1x8x128xf32> to vector<8x128xf32>
    %207 = arith.addf %204, %206 : vector<8x128xf32>
    %208 = vector.extract_strided_slice %207 {offsets = [0, 0], sizes = [8, 32], strides = [1, 1]} : vector<8x128xf32> to vector<8x32xf32>
    %209 = arith.addf %208, %168 : vector<8x32xf32>
    %c16 = arith.constant 16 : index
    %c0_102 = arith.constant 0 : index
    %c0_103 = arith.constant 0 : index
    %210 = vector.load %arg4[%c16, %c0_102, %c0_103] : memref<19x8x128xf32, #tpu.memory_space<vmem>>, vector<1x8x32xf32>
    %211 = vector.shape_cast %210 : vector<1x8x32xf32> to vector<8x32xf32>
    %c17 = arith.constant 17 : index
    %c0_104 = arith.constant 0 : index
    %c0_105 = arith.constant 0 : index
    %212 = vector.load %arg4[%c17, %c0_104, %c0_105] : memref<19x8x128xf32, #tpu.memory_space<vmem>>, vector<1x8x32xf32>
    %213 = vector.shape_cast %212 : vector<1x8x32xf32> to vector<8x32xf32>
    %cst_106 = arith.constant dense<0.000000e+00> : vector<8xf32>
    %214 = vector.multi_reduction <add>, %209, %cst_106 [1] : vector<8x32xf32> to vector<8xf32>
    %215 = vector.shape_cast %214 : vector<8xf32> to vector<8x1xf32>
    %cst_107 = arith.constant 3.200000e+01 : f32
    %216 = vector.broadcast %cst_107 : f32 to vector<8x1xf32>
    %217 = arith.divf %215, %216 : vector<8x1xf32>
    %218 = arith.mulf %209, %209 : vector<8x32xf32>
    %cst_108 = arith.constant dense<0.000000e+00> : vector<8xf32>
    %219 = vector.multi_reduction <add>, %218, %cst_108 [1] : vector<8x32xf32> to vector<8xf32>
    %220 = vector.shape_cast %219 : vector<8xf32> to vector<8x1xf32>
    %cst_109 = arith.constant 3.200000e+01 : f32
    %221 = vector.broadcast %cst_109 : f32 to vector<8x1xf32>
    %222 = arith.divf %220, %221 : vector<8x1xf32>
    %223 = arith.mulf %217, %217 : vector<8x1xf32>
    %224 = arith.subf %222, %223 : vector<8x1xf32>
    %225 = vector.broadcast %217 : vector<8x1xf32> to vector<8x32xf32>
    %226 = arith.subf %209, %225 : vector<8x32xf32>
    %cst_110 = arith.constant 9.99999974E-6 : f32
    %227 = vector.broadcast %cst_110 : f32 to vector<8x1xf32>
    %228 = arith.addf %224, %227 : vector<8x1xf32>
    %229 = math.rsqrt %228 : vector<8x1xf32>
    %230 = vector.broadcast %229 : vector<8x1xf32> to vector<8x32xf32>
    %231 = arith.mulf %226, %230 : vector<8x32xf32>
    %232 = arith.mulf %231, %211 : vector<8x32xf32>
    %233 = arith.addf %232, %213 : vector<8x32xf32>
    %c8_111 = arith.constant 8 : index
    %c0_112 = arith.constant 0 : index
    %c0_113 = arith.constant 0 : index
    %234 = vector.load %arg3[%c8_111, %c0_112, %c0_113] : memref<9x64x128xf32, #tpu.memory_space<vmem>>, vector<1x32x128xf32>
    %235 = vector.shape_cast %234 : vector<1x32x128xf32> to vector<32x128xf32>
    %cst_114 = arith.constant dense<0.000000e+00> : vector<8x128xf32>
    %236 = tpu.matmul %233, %235, %cst_114 {dimension_numbers = #tpu.dot_dimension_numbers<[1], [0], [0], [1], [0, 0, 1, 1], [], []>} : vector<8x32xf32>, vector<32x128xf32>, vector<8x128xf32> -> vector<8x128xf32>
    %c18 = arith.constant 18 : index
    %c0_115 = arith.constant 0 : index
    %c0_116 = arith.constant 0 : index
    %237 = vector.load %arg4[%c18, %c0_115, %c0_116] : memref<19x8x128xf32, #tpu.memory_space<vmem>>, vector<1x8x128xf32>
    %238 = vector.shape_cast %237 : vector<1x8x128xf32> to vector<8x128xf32>
    %239 = arith.addf %236, %238 : vector<8x128xf32>
    %cst_117 = arith.constant dense<0xFF800000> : vector<8xf32>
    %240 = vector.multi_reduction <maximumf>, %239, %cst_117 [1] : vector<8x128xf32> to vector<8xf32>
    %241 = vector.shape_cast %240 : vector<8xf32> to vector<8x1xf32>
    %242 = vector.broadcast %241 : vector<8x1xf32> to vector<8x128xf32>
    %243 = arith.subf %239, %242 : vector<8x128xf32>
    %244 = math.exp %243 : vector<8x128xf32>
    %cst_118 = arith.constant dense<0.000000e+00> : vector<8xf32>
    %245 = vector.multi_reduction <add>, %244, %cst_118 [1] : vector<8x128xf32> to vector<8xf32>
    %246 = vector.shape_cast %245 : vector<8xf32> to vector<8x1xf32>
    %247 = vector.broadcast %246 : vector<8x1xf32> to vector<8x128xf32>
    %248 = arith.divf %244, %247 : vector<8x128xf32>
    %c0_119 = arith.constant 0 : index
    %c0_120 = arith.constant 0 : index
    %249 = vector.load %arg5[%c0_119, %c0_120] : memref<8x128xf32, #tpu.memory_space<vmem>>, vector<8x128xf32>
    tpu.vector_store %arg5[%c0_119, %c0_120], %248 {strides = array<i32>} : memref<8x128xf32, #tpu.memory_space<vmem>>, vector<8x128xf32>,
    return
  }
}

</mosaic_0001>

<llo_original>
// kernel: nanogpt_forward.1
$region0: #{nanogpt_forward.1}
  #allocation0 [shape = 'u32[]', space=smem, size = 0x4, offset = 0x4, fixed_abs, tag = 'smem constant byte address 0x4 - core index']
  #allocation1 [shape = 'u32[144,128]{1,0:T(1,128)}', space=vmem, size = 0x12000, scoped, tag = 'internal scratch']
  %s0 = inlined_call_operand.vmem [shape: s32[8,1], index: 0, kind: input, shape index: {}]
  %s1 = inlined_call_operand.vmem [shape: f32[64,32], index: 1, kind: input, shape index: {}]
  %s2 = inlined_call_operand.vmem [shape: f32[8,32], index: 2, kind: input, shape index: {}]
  %s3 = inlined_call_operand.hbm [shape: f32[9,64,128], index: 3, kind: input, shape index: {}]
  %s4 = inlined_call_operand.hbm [shape: f32[19,8,128], index: 4, kind: input, shape index: {}]
  %s5 = inlined_call_operand.hbm [shape: f32[8,128], index: 5, kind: output, shape index: {}]
  %s6 = sld [smem:[#allocation0]]
  $region38: #{nanogpt_forward.1} parent=0
    _
  %s8 = ssub.s32 1, %s6
  %s9 = scalar_select 0, %s8, %s6
  $region1: #{nanogpt_forward.1} parent=0
    #allocation2 [shape = 'u8[294912]{0}', space=vmem, size = 0x48000, scoped, tag = 'input window, operand 3, single buffered']
    #allocation3 [shape = 's32[1]{0}', space=sflag, size = 0x4, scoped, tag = 'scoped memory for nanogpt_forward.1']
    #allocation4 [shape = 's32[1]{0}', space=sflag, size = 0x4, scoped, tag = 'scoped memory for nanogpt_forward.1']
    #allocation5 [shape = 'u8[77824]{0}', space=vmem, size = 0x13000, scoped, tag = 'input window, operand 4, single buffered']
    #allocation6 [shape = 's32[1]{0}', space=sflag, size = 0x4, scoped, tag = 'scoped memory for nanogpt_forward.1']
    #allocation7 [shape = 'u8[4096]{0}', space=vmem, size = 0x1000, scoped, tag = 'output window, operand 0, single buffered']
    %10 = vsyncpa [#allocation3], 0
    %11 = vsyncpa [#allocation6], 0
    %12 = vsyncpa [#allocation4], 0
    // Predicated region
    $region2: #{nanogpt_forward.1} parent=1 // pred_check
      _
    $region3: #{nanogpt_forward.1} parent=1 // pred_check_branch
      %14 = sbr.rel (0) target = $region5
    $region4: #{nanogpt_forward.1} parent=1 // pred_region
      _
    $region5: #{nanogpt_forward.1} parent=1 // pred_fallthru
      _
    // Predicated region
    $region6: #{nanogpt_forward.1} parent=1 // pred_check
      _
    $region7: #{nanogpt_forward.1} parent=1 // pred_check_branch
      %16 = sbr.rel (0) target = $region9
    $region8: #{nanogpt_forward.1} parent=1 // pred_region
      _
    $region9: #{nanogpt_forward.1} parent=1 // pred_fallthru
      _
    // Predicated region
    $region10: #{nanogpt_forward.1} parent=1 // pred_check
      _
    $region11: #{nanogpt_forward.1} parent=1 // pred_check_branch
      %18 = sbr.rel (0) target = $region13
    $region12: #{nanogpt_forward.1} parent=1 // pred_region
      _
    $region13: #{nanogpt_forward.1} parent=1 // pred_fallthru
      _
    // Predicated region
    $region14: #{nanogpt_forward.1} parent=1 // pred_check
      _
    $region15: #{nanogpt_forward.1} parent=1 // pred_check_branch
      %20 = sbr.rel (0) target = $region17
    $region16: #{nanogpt_forward.1} parent=1 // pred_region
      %s22 = ssub.s32 9216, 9216
      %23 = vsyncadd [#allocation3], %s22
      %s24 = sshll.u32 [#allocation2], 4
      %s25 = int_to_ptr.vmem [resolvable:$true] %s24
      %30 = dma.hbm_to_vmem [thread:$0]  %s3, 9216, %s25, [#allocation3], 128, 128, 8
    $region17: #{nanogpt_forward.1} parent=1 // pred_fallthru
      _
    // Predicated region
    $region18: #{nanogpt_forward.1} parent=1 // pred_check
      _
    $region19: #{nanogpt_forward.1} parent=1 // pred_check_branch
      %32 = sbr.rel (0) target = $region21
    $region20: #{nanogpt_forward.1} parent=1 // pred_region
      %s34 = ssub.s32 2432, 2432
      %35 = vsyncadd [#allocation6], %s34
      %s36 = sshll.u32 [#allocation5], 4
      %s37 = int_to_ptr.vmem [resolvable:$true] %s36
      %42 = dma.hbm_to_vmem [thread:$0]  %s4, 2432, %s37, [#allocation6], 128, 128, 8
    $region21: #{nanogpt_forward.1} parent=1 // pred_fallthru
      _
    // Predicated region
    $region22: #{nanogpt_forward.1} parent=1 // pred_check
      _
    $region23: #{nanogpt_forward.1} parent=1 // pred_check_branch
      %44 = sbr.rel (0) target = $region25
    $region24: #{nanogpt_forward.1} parent=1 // pred_region
      %45 = dma.done [#allocation3], 9216
    $region25: #{nanogpt_forward.1} parent=1 // pred_fallthru
      _
    // Predicated region
    $region26: #{nanogpt_forward.1} parent=1 // pred_check
      _
    $region27: #{nanogpt_forward.1} parent=1 // pred_check_branch
      %47 = sbr.rel (0) target = $region29
    $region28: #{nanogpt_forward.1} parent=1 // pred_region
      %48 = dma.done [#allocation6], 2432
    $region29: #{nanogpt_forward.1} parent=1 // pred_fallthru
      _
    %v49 = vlaneseq
    %v50 = vand.u32 %v49, 127
    %v51 = vld [vmem:[%s0] sm:$0xff]
    %52 = vset.pattern.permute.xlu0 0
    %53 = vperm.xlu0 %52, %v51
    %v54 = vpop.permute.xlu0 %53
    %vm55 = vcmp.eq.s32.totalorder %v50, %v54
    %v56 = vsel %vm55, 1, 0
    %v57 = vcvt.s32.f32 %v56
    %v58 = vld [vmem:[%s1] sm:$0xff]
    %v59 = vld [vmem:[%s1 + $0x8] sm:$0xff]
    %v60 = vld [vmem:[%s1 + $0x10] sm:$0xff]
    %v61 = vld [vmem:[%s1 + $0x18] sm:$0xff]
    %v62 = vld [vmem:[%s1 + $0x20] sm:$0xff]
    %v63 = vld [vmem:[%s1 + $0x28] sm:$0xff]
    %v64 = vld [vmem:[%s1 + $0x30] sm:$0xff]
    %v65 = vld [vmem:[%s1 + $0x38] sm:$0xff]
    %v66 = vld [vmem:[%s2] sm:$0xff]
    %vm67 = vcmask 523264
    %v69 = vsel %vm67, %v57, 0
    %71 = vmatprep.subr.mxu0 0.0
    %72 = vmatpush1.msra.mxu0 %v58
    %73 = vmatprep.subr.mxu0 0.0
    %74 = vmatpush1.msra.mxu0 %v59
    %75 = vmatprep.subr.mxu0 0.0
    %76 = vmatpush1.msra.mxu0 %v60
    %77 = vmatprep.subr.mxu0 0.0
    %78 = vmatpush1.msra.mxu0 %v61
    %79 = vmatprep.subr.mxu0 0.0
    %80 = vmatpush1.msra.mxu0 %v62
    %81 = vmatprep.subr.mxu0 0.0
    %82 = vmatpush1.msra.mxu0 %v63
    %83 = vmatprep.subr.mxu0 0.0
    %84 = vmatpush1.msra.mxu0 %v64
    %85 = vmatprep.subr.mxu0 0.0
    %86 = vmatpush1.msra.mxu0 %v65
    %87 = vmatprep.subr.mxu0 0.0
    %88 = vmatpush1.msra.mxu0 0.0
    %89 = vmatprep.subr.mxu0 0.0
    %90 = vmatpush1.msra.mxu0 0.0
    %91 = vmatprep.subr.mxu0 0.0
    %92 = vmatpush1.msra.mxu0 0.0
    %93 = vmatprep.subr.mxu0 0.0
    %94 = vmatpush1.msra.mxu0 0.0
    %95 = vmatprep.subr.mxu0 0.0
    %96 = vmatpush1.msra.mxu0 0.0
    %97 = vmatprep.subr.mxu0 0.0
    %98 = vmatpush1.msra.mxu0 0.0
    %99 = vmatprep.subr.mxu0 0.0
    %100 = vmatpush1.msra.mxu0 0.0
    %101 = vmatprep.subr.mxu0 0.0
    %102 = vmatpush1.msra.mxu0 0.0
    %103 = vmatprep.subr.mxu0 0.0
    %104 = vmatpush1.msra.mxu0 0.0
    %105 = vmatprep.subr.mxu0 0.0
    %106 = vmatpush1.msra.mxu0 0.0
    %107 = vmatprep.subr.mxu0 0.0
    %108 = vmatpush1.msra.mxu0 0.0
    %109 = vmatprep.subr.mxu0 0.0
    %110 = vmatpush1.msra.mxu0 0.0
    %111 = vmatprep.subr.mxu0 0.0
    %112 = vmatpush1.msra.mxu0 0.0
    %113 = vmatprep.subr.mxu0 0.0
    %114 = vmatpush1.msra.mxu0 0.0
    %115 = vmatprep.subr.mxu0 0.0
    %116 = vmatpush1.msra.mxu0 0.0
    %117 = vmatprep.subr.mxu0 0.0
    %118 = vmatpush1.msra.mxu0 0.0
    %119 = vmatprep.subr.mxu0 0.0
    %120 = vmatpush1.msra.mxu0 0.0
    %121 = vmatprep.subr.mxu0 0.0
    %122 = vmatpush1.msra.mxu0 0.0
    %123 = vmatprep.subr.mxu0 0.0
    %124 = vmatpush1.msra.mxu0 0.0
    %125 = vmatprep.subr.mxu0 0.0
    %126 = vmatpush1.msra.mxu0 0.0
    %127 = vmatprep.subr.mxu0 0.0
    %128 = vmatpush1.msra.mxu0 0.0
    %129 = vmatprep.subr.mxu0 0.0
    %130 = vmatpush1.msra.mxu0 0.0
    %131 = vmatprep.subr.mxu0 0.0
    %132 = vmatpush1.msra.mxu0 0.0
    %133 = vmatprep.subr.mxu0 0.0
    %134 = vmatpush1.msra.mxu0 0.0
    %135 = vmatprep.mubr.f32.mxu0 0.0
    %136 = vmatmul.mubr.f32.gmra.mrb[0].mxu0 %v69
    %v137 = vpop.f32.mrb[0].mxu0
    %v138 = vadd.f32 %v66, %v137
    %v139 = vpop.f32.mrb[0].mxu0
    %140 = vdwg.mxu0
    %v141 = vld [vmem:[#allocation5] sm:$0xff]
    %s142 = scalar_lea.vmem [#allocation5], 8
    %v143 = vld [vmem:[%s142] sm:$0xff]
    %vm144 = vcmask 261120
    %v145 = vsel %vm144, %v138, 0.0
    %146 = vadd.xlane.f32.xlu0 %v145
    %v147 = vpop.xlane.xlu0 %146
    %v148 = vrcp.pop 32.0
    %v149 = vmul.f32 %v147, %v148
    %v150 = vmul.f32 %v138, %v138
    %v151 = vsel %vm144, %v150, 0.0
    %152 = vadd.xlane.f32.xlu0 %v151
    %v153 = vpop.xlane.xlu0 %152
    %v154 = vmul.f32 %v153, %v148
    %v155 = vmul.f32 %v149, %v149
    %v156 = vsub.f32 %v154, %v155
    %v157 = vsub.f32 %v138, %v149
    %v158 = vadd.f32 %v156, 1e-05
    %v159 = vrsqrt.pop %v158
    %v160 = vmul.f32 %v157, %v159
    %v161 = vmul.f32 %v160, %v141
    %v162 = vadd.f32 %v161, %v143
    %v163 = vld [vmem:[#allocation2] sm:$0xff]
    %v164 = vld [vmem:[#allocation2 + $0x8] sm:$0xff]
    %v165 = vld [vmem:[#allocation2 + $0x10] sm:$0xff]
    %v166 = vld [vmem:[#allocation2 + $0x18] sm:$0xff]
    %s167 = scalar_lea.vmem [#allocation5], 16
    %v168 = vld [vmem:[%s167] sm:$0xff]
    %v170 = vsel %vm144, %v162, 0
    %172 = vmatprep.subr.mxu0 0.0
    %173 = vmatpush1.msra.mxu0 %v163
    %174 = vmatprep.subr.mxu0 0.0
    %175 = vmatpush1.msra.mxu0 %v164
    %176 = vmatprep.subr.mxu0 0.0
    %177 = vmatpush1.msra.mxu0 %v165
    %178 = vmatprep.subr.mxu0 0.0
    %179 = vmatpush1.msra.mxu0 %v166
    %180 = vmatprep.subr.mxu0 0.0
    %181 = vmatpush1.msra.mxu0 0.0
    %182 = vmatprep.subr.mxu0 0.0
    %183 = vmatpush1.msra.mxu0 0.0
    %184 = vmatprep.subr.mxu0 0.0
    %185 = vmatpush1.msra.mxu0 0.0
    %186 = vmatprep.subr.mxu0 0.0
    %187 = vmatpush1.msra.mxu0 0.0
    %188 = vmatprep.subr.mxu0 0.0
    %189 = vmatpush1.msra.mxu0 0.0
    %190 = vmatprep.subr.mxu0 0.0
    %191 = vmatpush1.msra.mxu0 0.0
    %192 = vmatprep.subr.mxu0 0.0
    %193 = vmatpush1.msra.mxu0 0.0
    %194 = vmatprep.subr.mxu0 0.0
    %195 = vmatpush1.msra.mxu0 0.0
    %196 = vmatprep.subr.mxu0 0.0
    %197 = vmatpush1.msra.mxu0 0.0
    %198 = vmatprep.subr.mxu0 0.0
    %199 = vmatpush1.msra.mxu0 0.0
    %200 = vmatprep.subr.mxu0 0.0
    %201 = vmatpush1.msra.mxu0 0.0
    %202 = vmatprep.subr.mxu0 0.0
    %203 = vmatpush1.msra.mxu0 0.0
    %204 = vmatprep.subr.mxu0 0.0
    %205 = vmatpush1.msra.mxu0 0.0
    %206 = vmatprep.subr.mxu0 0.0
    %207 = vmatpush1.msra.mxu0 0.0
    %208 = vmatprep.subr.mxu0 0.0
    %209 = vmatpush1.msra.mxu0 0.0
    %210 = vmatprep.subr.mxu0 0.0
    %211 = vmatpush1.msra.mxu0 0.0
    %212 = vmatprep.subr.mxu0 0.0
    %213 = vmatpush1.msra.mxu0 0.0
    %214 = vmatprep.subr.mxu0 0.0
    %215 = vmatpush1.msra.mxu0 0.0
    %216 = vmatprep.subr.mxu0 0.0
    %217 = vmatpush1.msra.mxu0 0.0
    %218 = vmatprep.subr.mxu0 0.0
    %219 = vmatpush1.msra.mxu0 0.0
    %220 = vmatprep.subr.mxu0 0.0
    %221 = vmatpush1.msra.mxu0 0.0
    %222 = vmatprep.subr.mxu0 0.0
    %223 = vmatpush1.msra.mxu0 0.0
    %224 = vmatprep.subr.mxu0 0.0
    %225 = vmatpush1.msra.mxu0 0.0
    %226 = vmatprep.subr.mxu0 0.0
    %227 = vmatpush1.msra.mxu0 0.0
    %228 = vmatprep.subr.mxu0 0.0
    %229 = vmatpush1.msra.mxu0 0.0
    %230 = vmatprep.subr.mxu0 0.0
    %231 = vmatpush1.msra.mxu0 0.0
    %232 = vmatprep.subr.mxu0 0.0
    %233 = vmatpush1.msra.mxu0 0.0
    %234 = vmatprep.subr.mxu0 0.0
    %235 = vmatpush1.msra.mxu0 0.0
    %236 = vmatprep.mubr.f32.mxu0 0.0
    %237 = vmatmul.mubr.f32.gmra.mrb[0].mxu0 %v170
    %v238 = vpop.f32.mrb[0].mxu0
    %v239 = vadd.f32 %v168, %v238
    %v240 = vpop.f32.mrb[0].mxu0
    %241 = vdwg.mxu0
    %243 = vrot.lane.b32.xlu0 %v239, 96
    %v244 = vpop.permute.xlu0 %243
    %v245 = vsel %vm144, %v239, 0
    %v247 = vsel %vm144, %v244, 0
    %249 = vmatprep.subr.mxu0 0.0
    %250 = vmatpush1.xpose.msra.mxu0 %v247
    %251 = vmatprep.subr.mxu0 0.0
    %252 = vmatpush1.xpose.msra.mxu0 0.0
    %253 = vmatprep.subr.mxu0 0.0
    %254 = vmatpush1.xpose.msra.mxu0 0.0
    %255 = vmatprep.subr.mxu0 0.0
    %256 = vmatpush1.xpose.msra.mxu0 0.0
    %257 = vmatprep.subr.mxu0 0.0
    %258 = vmatpush1.xpose.msra.mxu0 0.0
    %259 = vmatprep.subr.mxu0 0.0
    %260 = vmatpush1.xpose.msra.mxu0 0.0
    %261 = vmatprep.subr.mxu0 0.0
    %262 = vmatpush1.xpose.msra.mxu0 0.0
    %263 = vmatprep.subr.mxu0 0.0
    %264 = vmatpush1.xpose.msra.mxu0 0.0
    %265 = vmatprep.subr.mxu0 0.0
    %266 = vmatpush1.xpose.msra.mxu0 0.0
    %267 = vmatprep.subr.mxu0 0.0
    %268 = vmatpush1.xpose.msra.mxu0 0.0
    %269 = vmatprep.subr.mxu0 0.0
    %270 = vmatpush1.xpose.msra.mxu0 0.0
    %271 = vmatprep.subr.mxu0 0.0
    %272 = vmatpush1.xpose.msra.mxu0 0.0
    %273 = vmatprep.subr.mxu0 0.0
    %274 = vmatpush1.xpose.msra.mxu0 0.0
    %275 = vmatprep.subr.mxu0 0.0
    %276 = vmatpush1.xpose.msra.mxu0 0.0
    %277 = vmatprep.subr.mxu0 0.0
    %278 = vmatpush1.xpose.msra.mxu0 0.0
    %279 = vmatprep.subr.mxu0 0.0
    %280 = vmatpush1.xpose.msra.mxu0 0.0
    %281 = vmatprep.subr.mxu0 0.0
    %282 = vmatpush1.xpose.msra.mxu0 0.0
    %283 = vmatprep.subr.mxu0 0.0
    %284 = vmatpush1.xpose.msra.mxu0 0.0
    %285 = vmatprep.subr.mxu0 0.0
    %286 = vmatpush1.xpose.msra.mxu0 0.0
    %287 = vmatprep.subr.mxu0 0.0
    %288 = vmatpush1.xpose.msra.mxu0 0.0
    %289 = vmatprep.subr.mxu0 0.0
    %290 = vmatpush1.xpose.msra.mxu0 0.0
    %291 = vmatprep.subr.mxu0 0.0
    %292 = vmatpush1.xpose.msra.mxu0 0.0
    %293 = vmatprep.subr.mxu0 0.0
    %294 = vmatpush1.xpose.msra.mxu0 0.0
    %295 = vmatprep.subr.mxu0 0.0
    %296 = vmatpush1.xpose.msra.mxu0 0.0
    %297 = vmatprep.subr.mxu0 0.0
    %298 = vmatpush1.xpose.msra.mxu0 0.0
    %299 = vmatprep.subr.mxu0 0.0
    %300 = vmatpush1.xpose.msra.mxu0 0.0
    %301 = vmatprep.subr.mxu0 0.0
    %302 = vmatpush1.xpose.msra.mxu0 0.0
    %303 = vmatprep.subr.mxu0 0.0
    %304 = vmatpush1.xpose.msra.mxu0 0.0
    %305 = vmatprep.subr.mxu0 0.0
    %306 = vmatpush1.xpose.msra.mxu0 0.0
    %307 = vmatprep.subr.mxu0 0.0
    %308 = vmatpush1.xpose.msra.mxu0 0.0
    %309 = vmatprep.subr.mxu0 0.0
    %310 = vmatpush1.xpose.msra.mxu0 0.0
    %311 = vmatprep.subr.mxu0 0.0
    %312 = vmatpush1.xpose.msra.mxu0 0.0
    %313 = vmatprep.mubr.f32.mxu0 0.0
    %314 = vmatmul.mubr.f32.gmra.mrb[0].mxu0 %v245
    %v315 = vpop.f32.mrb[0].mxu0
    %v316 = vadd.f32 0.0, %v315
    %v317 = vpop.f32.mrb[0].mxu0
    %318 = vdwg.mxu0
    %v319 = vlaneseq
    %v320 = vshrl.u32 %v319, 7
    %vm321 = vcmp.le.s32.totalorder %v50, %v320
    %v322 = vsel %vm321, -1e+09, %v316
    %vm323 = vcmask 64512
    %v324 = vsel %vm323, %v322, -inf
    %325 = vmax.xlane.f32.xlu0 %v324
    %v326 = vpop.xlane.xlu0 %325
    %v327 = vsub.f32 %v322, %v326
    %v328 = vmul.f32 %v327, 1.442695
    %v329 = vpow.pop %v328
    %v330 = vsel %vm323, %v329, 0.0
    %331 = vadd.xlane.f32.xlu0 %v330
    %v332 = vpop.xlane.xlu0 %331
    %v333 = vrcp.pop %v332
    %v334 = vmul.f32 %v329, %v333
    %335 = vrot.lane.b32.xlu0 %v239, 64
    %v336 = vpop.permute.xlu0 %335
    %v339 = vsel %vm323, %v334, 0
    %341 = vmatprep.subr.mxu0 0.0
    %342 = vmatpush1.msra.mxu0 %v336
    %343 = vmatprep.subr.mxu0 0.0
    %344 = vmatpush1.msra.mxu0 0.0
    %345 = vmatprep.subr.mxu0 0.0
    %346 = vmatpush1.msra.mxu0 0.0
    %347 = vmatprep.subr.mxu0 0.0
    %348 = vmatpush1.msra.mxu0 0.0
    %349 = vmatprep.subr.mxu0 0.0
    %350 = vmatpush1.msra.mxu0 0.0
    %351 = vmatprep.subr.mxu0 0.0
    %352 = vmatpush1.msra.mxu0 0.0
    %353 = vmatprep.subr.mxu0 0.0
    %354 = vmatpush1.msra.mxu0 0.0
    %355 = vmatprep.subr.mxu0 0.0
    %356 = vmatpush1.msra.mxu0 0.0
    %357 = vmatprep.subr.mxu0 0.0
    %358 = vmatpush1.msra.mxu0 0.0
    %359 = vmatprep.subr.mxu0 0.0
    %360 = vmatpush1.msra.mxu0 0.0
    %361 = vmatprep.subr.mxu0 0.0
    %362 = vmatpush1.msra.mxu0 0.0
    %363 = vmatprep.subr.mxu0 0.0
    %364 = vmatpush1.msra.mxu0 0.0
    %365 = vmatprep.subr.mxu0 0.0
    %366 = vmatpush1.msra.mxu0 0.0
    %367 = vmatprep.subr.mxu0 0.0
    %368 = vmatpush1.msra.mxu0 0.0
    %369 = vmatprep.subr.mxu0 0.0
    %370 = vmatpush1.msra.mxu0 0.0
    %371 = vmatprep.subr.mxu0 0.0
    %372 = vmatpush1.msra.mxu0 0.0
    %373 = vmatprep.subr.mxu0 0.0
    %374 = vmatpush1.msra.mxu0 0.0
    %375 = vmatprep.subr.mxu0 0.0
    %376 = vmatpush1.msra.mxu0 0.0
    %377 = vmatprep.subr.mxu0 0.0
    %378 = vmatpush1.msra.mxu0 0.0
    %379 = vmatprep.subr.mxu0 0.0
    %380 = vmatpush1.msra.mxu0 0.0
    %381 = vmatprep.subr.mxu0 0.0
    %382 = vmatpush1.msra.mxu0 0.0
    %383 = vmatprep.subr.mxu0 0.0
    %384 = vmatpush1.msra.mxu0 0.0
    %385 = vmatprep.subr.mxu0 0.0
    %386 = vmatpush1.msra.mxu0 0.0
    %387 = vmatprep.subr.mxu0 0.0
    %388 = vmatpush1.msra.mxu0 0.0
    %389 = vmatprep.subr.mxu0 0.0
    %390 = vmatpush1.msra.mxu0 0.0
    %391 = vmatprep.subr.mxu0 0.0
    %392 = vmatpush1.msra.mxu0 0.0
    %393 = vmatprep.subr.mxu0 0.0
    %394 = vmatpush1.msra.mxu0 0.0
    %395 = vmatprep.subr.mxu0 0.0
    %396 = vmatpush1.msra.mxu0 0.0
    %397 = vmatprep.subr.mxu0 0.0
    %398 = vmatpush1.msra.mxu0 0.0
    %399 = vmatprep.subr.mxu0 0.0
    %400 = vmatpush1.msra.mxu0 0.0
    %401 = vmatprep.subr.mxu0 0.0
    %402 = vmatpush1.msra.mxu0 0.0
    %403 = vmatprep.subr.mxu0 0.0
    %404 = vmatpush1.msra.mxu0 0.0
    %405 = vmatprep.mubr.f32.mxu0 0.0
    %406 = vmatmul.mubr.f32.gmra.mrb[0].mxu0 %v339
    %v407 = vpop.f32.mrb[0].mxu0
    %v408 = vadd.f32 %v162, %v407
    %v409 = vpop.f32.mrb[0].mxu0
    %410 = vdwg.mxu0
    %s411 = scalar_lea.vmem [#allocation2], 64
    %v412 = vld [vmem:[%s411] sm:$0xff]
    %v413 = vld [vmem:[%s411 + $0x8] sm:$0xff]
    %v414 = vld [vmem:[%s411 + $0x10] sm:$0xff]
    %v415 = vld [vmem:[%s411 + $0x18] sm:$0xff]
    %s416 = scalar_lea.vmem [#allocation5], 24
    %v417 = vld [vmem:[%s416] sm:$0xff]
    %v419 = vsel %vm144, %v408, 0
    %421 = vmatprep.subr.mxu0 0.0
    %422 = vmatpush1.msra.mxu0 %v412
    %423 = vmatprep.subr.mxu0 0.0
    %424 = vmatpush1.msra.mxu0 %v413
    %425 = vmatprep.subr.mxu0 0.0
    %426 = vmatpush1.msra.mxu0 %v414
    %427 = vmatprep.subr.mxu0 0.0
    %428 = vmatpush1.msra.mxu0 %v415
    %429 = vmatprep.subr.mxu0 0.0
    %430 = vmatpush1.msra.mxu0 0.0
    %431 = vmatprep.subr.mxu0 0.0
    %432 = vmatpush1.msra.mxu0 0.0
    %433 = vmatprep.subr.mxu0 0.0
    %434 = vmatpush1.msra.mxu0 0.0
    %435 = vmatprep.subr.mxu0 0.0
    %436 = vmatpush1.msra.mxu0 0.0
    %437 = vmatprep.subr.mxu0 0.0
    %438 = vmatpush1.msra.mxu0 0.0
    %439 = vmatprep.subr.mxu0 0.0
    %440 = vmatpush1.msra.mxu0 0.0
    %441 = vmatprep.subr.mxu0 0.0
    %442 = vmatpush1.msra.mxu0 0.0
    %443 = vmatprep.subr.mxu0 0.0
    %444 = vmatpush1.msra.mxu0 0.0
    %445 = vmatprep.subr.mxu0 0.0
    %446 = vmatpush1.msra.mxu0 0.0
    %447 = vmatprep.subr.mxu0 0.0
    %448 = vmatpush1.msra.mxu0 0.0
    %449 = vmatprep.subr.mxu0 0.0
    %450 = vmatpush1.msra.mxu0 0.0
    %451 = vmatprep.subr.mxu0 0.0
    %452 = vmatpush1.msra.mxu0 0.0
    %453 = vmatprep.subr.mxu0 0.0
    %454 = vmatpush1.msra.mxu0 0.0
    %455 = vmatprep.subr.mxu0 0.0
    %456 = vmatpush1.msra.mxu0 0.0
    %457 = vmatprep.subr.mxu0 0.0
    %458 = vmatpush1.msra.mxu0 0.0
    %459 = vmatprep.subr.mxu0 0.0
    %460 = vmatpush1.msra.mxu0 0.0
    %461 = vmatprep.subr.mxu0 0.0
    %462 = vmatpush1.msra.mxu0 0.0
    %463 = vmatprep.subr.mxu0 0.0
    %464 = vmatpush1.msra.mxu0 0.0
    %465 = vmatprep.subr.mxu0 0.0
    %466 = vmatpush1.msra.mxu0 0.0
    %467 = vmatprep.subr.mxu0 0.0
    %468 = vmatpush1.msra.mxu0 0.0
    %469 = vmatprep.subr.mxu0 0.0
    %470 = vmatpush1.msra.mxu0 0.0
    %471 = vmatprep.subr.mxu0 0.0
    %472 = vmatpush1.msra.mxu0 0.0
    %473 = vmatprep.subr.mxu0 0.0
    %474 = vmatpush1.msra.mxu0 0.0
    %475 = vmatprep.subr.mxu0 0.0
    %476 = vmatpush1.msra.mxu0 0.0
    %477 = vmatprep.subr.mxu0 0.0
    %478 = vmatpush1.msra.mxu0 0.0
    %479 = vmatprep.subr.mxu0 0.0
    %480 = vmatpush1.msra.mxu0 0.0
    %481 = vmatprep.subr.mxu0 0.0
    %482 = vmatpush1.msra.mxu0 0.0
    %483 = vmatprep.subr.mxu0 0.0
    %484 = vmatpush1.msra.mxu0 0.0
    %485 = vmatprep.mubr.f32.mxu0 0.0
    %486 = vmatmul.mubr.f32.gmra.mrb[0].mxu0 %v419
    %v487 = vpop.f32.mrb[0].mxu0
    %v488 = vadd.f32 %v417, %v487
    %v489 = vpop.f32.mrb[0].mxu0
    %490 = vdwg.mxu0
    %v491 = vadd.f32 %v488, %v138
    %s492 = scalar_lea.vmem [#allocation5], 32
    %v493 = vld [vmem:[%s492] sm:$0xff]
    %s494 = scalar_lea.vmem [#allocation5], 40
    %v495 = vld [vmem:[%s494] sm:$0xff]
    %v496 = vsel %vm144, %v491, 0.0
    %497 = vadd.xlane.f32.xlu0 %v496
    %v498 = vpop.xlane.xlu0 %497
    %v499 = vmul.f32 %v498, %v148
    %v500 = vmul.f32 %v491, %v491
    %v501 = vsel %vm144, %v500, 0.0
    %502 = vadd.xlane.f32.xlu0 %v501
    %v503 = vpop.xlane.xlu0 %502
    %v504 = vmul.f32 %v503, %v148
    %v505 = vmul.f32 %v499, %v499
    %v506 = vsub.f32 %v504, %v505
    %v507 = vsub.f32 %v491, %v499
    %v508 = vadd.f32 %v506, 1e-05
    %v509 = vrsqrt.pop %v508
    %v510 = vmul.f32 %v507, %v509
    %v511 = vmul.f32 %v510, %v493
    %v512 = vadd.f32 %v511, %v495
    %s513 = scalar_lea.vmem [#allocation2], 128
    %v514 = vld [vmem:[%s513] sm:$0xff]
    %v515 = vld [vmem:[%s513 + $0x8] sm:$0xff]
    %v516 = vld [vmem:[%s513 + $0x10] sm:$0xff]
    %v517 = vld [vmem:[%s513 + $0x18] sm:$0xff]
    %s518 = scalar_lea.vmem [#allocation5], 48
    %v519 = vld [vmem:[%s518] sm:$0xff]
    %v521 = vsel %vm144, %v512, 0
    %523 = vmatprep.subr.mxu0 0.0
    %524 = vmatpush1.msra.mxu0 %v514
    %525 = vmatprep.subr.mxu0 0.0
    %526 = vmatpush1.msra.mxu0 %v515
    %527 = vmatprep.subr.mxu0 0.0
    %528 = vmatpush1.msra.mxu0 %v516
    %529 = vmatprep.subr.mxu0 0.0
    %530 = vmatpush1.msra.mxu0 %v517
    %531 = vmatprep.subr.mxu0 0.0
    %532 = vmatpush1.msra.mxu0 0.0
    %533 = vmatprep.subr.mxu0 0.0
    %534 = vmatpush1.msra.mxu0 0.0
    %535 = vmatprep.subr.mxu0 0.0
    %536 = vmatpush1.msra.mxu0 0.0
    %537 = vmatprep.subr.mxu0 0.0
    %538 = vmatpush1.msra.mxu0 0.0
    %539 = vmatprep.subr.mxu0 0.0
    %540 = vmatpush1.msra.mxu0 0.0
    %541 = vmatprep.subr.mxu0 0.0
    %542 = vmatpush1.msra.mxu0 0.0
    %543 = vmatprep.subr.mxu0 0.0
    %544 = vmatpush1.msra.mxu0 0.0
    %545 = vmatprep.subr.mxu0 0.0
    %546 = vmatpush1.msra.mxu0 0.0
    %547 = vmatprep.subr.mxu0 0.0
    %548 = vmatpush1.msra.mxu0 0.0
    %549 = vmatprep.subr.mxu0 0.0
    %550 = vmatpush1.msra.mxu0 0.0
    %551 = vmatprep.subr.mxu0 0.0
    %552 = vmatpush1.msra.mxu0 0.0
    %553 = vmatprep.subr.mxu0 0.0
    %554 = vmatpush1.msra.mxu0 0.0
    %555 = vmatprep.subr.mxu0 0.0
    %556 = vmatpush1.msra.mxu0 0.0
    %557 = vmatprep.subr.mxu0 0.0
    %558 = vmatpush1.msra.mxu0 0.0
    %559 = vmatprep.subr.mxu0 0.0
    %560 = vmatpush1.msra.mxu0 0.0
    %561 = vmatprep.subr.mxu0 0.0
    %562 = vmatpush1.msra.mxu0 0.0
    %563 = vmatprep.subr.mxu0 0.0
    %564 = vmatpush1.msra.mxu0 0.0
    %565 = vmatprep.subr.mxu0 0.0
    %566 = vmatpush1.msra.mxu0 0.0
    %567 = vmatprep.subr.mxu0 0.0
    %568 = vmatpush1.msra.mxu0 0.0
    %569 = vmatprep.subr.mxu0 0.0
    %570 = vmatpush1.msra.mxu0 0.0
    %571 = vmatprep.subr.mxu0 0.0
    %572 = vmatpush1.msra.mxu0 0.0
    %573 = vmatprep.subr.mxu0 0.0
    %574 = vmatpush1.msra.mxu0 0.0
    %575 = vmatprep.subr.mxu0 0.0
    %576 = vmatpush1.msra.mxu0 0.0
    %577 = vmatprep.subr.mxu0 0.0
    %578 = vmatpush1.msra.mxu0 0.0
    %579 = vmatprep.subr.mxu0 0.0
    %580 = vmatpush1.msra.mxu0 0.0
    %581 = vmatprep.subr.mxu0 0.0
    %582 = vmatpush1.msra.mxu0 0.0
    %583 = vmatprep.subr.mxu0 0.0
    %584 = vmatpush1.msra.mxu0 0.0
    %585 = vmatprep.subr.mxu0 0.0
    %586 = vmatpush1.msra.mxu0 0.0
    %587 = vmatprep.mubr.f32.mxu0 0.0
    %588 = vmatmul.mubr.f32.gmra.mrb[0].mxu0 %v521
    %v589 = vpop.f32.mrb[0].mxu0
    %v590 = vadd.f32 %v519, %v589
    %v591 = vpop.f32.mrb[0].mxu0
    %592 = vdwg.mxu0
    %v593 = vmax.f32 %v590, 0.0
    %s594 = scalar_lea.vmem [#allocation2], 192
    %v595 = vld [vmem:[%s594] sm:$0xff]
    %v596 = vld [vmem:[%s594 + $0x8] sm:$0xff]
    %v597 = vld [vmem:[%s594 + $0x10] sm:$0xff]
    %v598 = vld [vmem:[%s594 + $0x18] sm:$0xff]
    %v599 = vld [vmem:[%s594 + $0x20] sm:$0xff]
    %v600 = vld [vmem:[%s594 + $0x28] sm:$0xff]
    %v601 = vld [vmem:[%s594 + $0x30] sm:$0xff]
    %v602 = vld [vmem:[%s594 + $0x38] sm:$0xff]
    %s603 = scalar_lea.vmem [#allocation5], 56
    %v604 = vld [vmem:[%s603] sm:$0xff]
    %v606 = vsel %vm67, %v593, 0
    %608 = vmatprep.subr.mxu0 0.0
    %609 = vmatpush1.msra.mxu0 %v595
    %610 = vmatprep.subr.mxu0 0.0
    %611 = vmatpush1.msra.mxu0 %v596
    %612 = vmatprep.subr.mxu0 0.0
    %613 = vmatpush1.msra.mxu0 %v597
    %614 = vmatprep.subr.mxu0 0.0
    %615 = vmatpush1.msra.mxu0 %v598
    %616 = vmatprep.subr.mxu0 0.0
    %617 = vmatpush1.msra.mxu0 %v599
    %618 = vmatprep.subr.mxu0 0.0
    %619 = vmatpush1.msra.mxu0 %v600
    %620 = vmatprep.subr.mxu0 0.0
    %621 = vmatpush1.msra.mxu0 %v601
    %622 = vmatprep.subr.mxu0 0.0
    %623 = vmatpush1.msra.mxu0 %v602
    %624 = vmatprep.subr.mxu0 0.0
    %625 = vmatpush1.msra.mxu0 0.0
    %626 = vmatprep.subr.mxu0 0.0
    %627 = vmatpush1.msra.mxu0 0.0
    %628 = vmatprep.subr.mxu0 0.0
    %629 = vmatpush1.msra.mxu0 0.0
    %630 = vmatprep.subr.mxu0 0.0
    %631 = vmatpush1.msra.mxu0 0.0
    %632 = vmatprep.subr.mxu0 0.0
    %633 = vmatpush1.msra.mxu0 0.0
    %634 = vmatprep.subr.mxu0 0.0
    %635 = vmatpush1.msra.mxu0 0.0
    %636 = vmatprep.subr.mxu0 0.0
    %637 = vmatpush1.msra.mxu0 0.0
    %638 = vmatprep.subr.mxu0 0.0
    %639 = vmatpush1.msra.mxu0 0.0
    %640 = vmatprep.subr.mxu0 0.0
    %641 = vmatpush1.msra.mxu0 0.0
    %642 = vmatprep.subr.mxu0 0.0
    %643 = vmatpush1.msra.mxu0 0.0
    %644 = vmatprep.subr.mxu0 0.0
    %645 = vmatpush1.msra.mxu0 0.0
    %646 = vmatprep.subr.mxu0 0.0
    %647 = vmatpush1.msra.mxu0 0.0
    %648 = vmatprep.subr.mxu0 0.0
    %649 = vmatpush1.msra.mxu0 0.0
    %650 = vmatprep.subr.mxu0 0.0
    %651 = vmatpush1.msra.mxu0 0.0
    %652 = vmatprep.subr.mxu0 0.0
    %653 = vmatpush1.msra.mxu0 0.0
    %654 = vmatprep.subr.mxu0 0.0
    %655 = vmatpush1.msra.mxu0 0.0
    %656 = vmatprep.subr.mxu0 0.0
    %657 = vmatpush1.msra.mxu0 0.0
    %658 = vmatprep.subr.mxu0 0.0
    %659 = vmatpush1.msra.mxu0 0.0
    %660 = vmatprep.subr.mxu0 0.0
    %661 = vmatpush1.msra.mxu0 0.0
    %662 = vmatprep.subr.mxu0 0.0
    %663 = vmatpush1.msra.mxu0 0.0
    %664 = vmatprep.subr.mxu0 0.0
    %665 = vmatpush1.msra.mxu0 0.0
    %666 = vmatprep.subr.mxu0 0.0
    %667 = vmatpush1.msra.mxu0 0.0
    %668 = vmatprep.subr.mxu0 0.0
    %669 = vmatpush1.msra.mxu0 0.0
    %670 = vmatprep.subr.mxu0 0.0
    %671 = vmatpush1.msra.mxu0 0.0
    %672 = vmatprep.mubr.f32.mxu0 0.0
    %673 = vmatmul.mubr.f32.gmra.mrb[0].mxu0 %v606
    %v674 = vpop.f32.mrb[0].mxu0
    %v675 = vadd.f32 %v604, %v674
    %v676 = vpop.f32.mrb[0].mxu0
    %677 = vdwg.mxu0
    %v678 = vadd.f32 %v675, %v491
    %s679 = scalar_lea.vmem [#allocation5], 64
    %v680 = vld [vmem:[%s679] sm:$0xff]
    %s681 = scalar_lea.vmem [#allocation5], 72
    %v682 = vld [vmem:[%s681] sm:$0xff]
    %v683 = vsel %vm144, %v678, 0.0
    %684 = vadd.xlane.f32.xlu0 %v683
    %v685 = vpop.xlane.xlu0 %684
    %v686 = vmul.f32 %v685, %v148
    %v687 = vmul.f32 %v678, %v678
    %v688 = vsel %vm144, %v687, 0.0
    %689 = vadd.xlane.f32.xlu0 %v688
    %v690 = vpop.xlane.xlu0 %689
    %v691 = vmul.f32 %v690, %v148
    %v692 = vmul.f32 %v686, %v686
    %v693 = vsub.f32 %v691, %v692
    %v694 = vsub.f32 %v678, %v686
    %v695 = vadd.f32 %v693, 1e-05
    %v696 = vrsqrt.pop %v695
    %v697 = vmul.f32 %v694, %v696
    %v698 = vmul.f32 %v697, %v680
    %v699 = vadd.f32 %v698, %v682
    %s700 = scalar_lea.vmem [#allocation2], 256
    %v701 = vld [vmem:[%s700] sm:$0xff]
    %v702 = vld [vmem:[%s700 + $0x8] sm:$0xff]
    %v703 = vld [vmem:[%s700 + $0x10] sm:$0xff]
    %v704 = vld [vmem:[%s700 + $0x18] sm:$0xff]
    %s705 = scalar_lea.vmem [#allocation5], 80
    %v706 = vld [vmem:[%s705] sm:$0xff]
    %v708 = vsel %vm144, %v699, 0
    %710 = vmatprep.subr.mxu0 0.0
    %711 = vmatpush1.msra.mxu0 %v701
    %712 = vmatprep.subr.mxu0 0.0
    %713 = vmatpush1.msra.mxu0 %v702
    %714 = vmatprep.subr.mxu0 0.0
    %715 = vmatpush1.msra.mxu0 %v703
    %716 = vmatprep.subr.mxu0 0.0
    %717 = vmatpush1.msra.mxu0 %v704
    %718 = vmatprep.subr.mxu0 0.0
    %719 = vmatpush1.msra.mxu0 0.0
    %720 = vmatprep.subr.mxu0 0.0
    %721 = vmatpush1.msra.mxu0 0.0
    %722 = vmatprep.subr.mxu0 0.0
    %723 = vmatpush1.msra.mxu0 0.0
    %724 = vmatprep.subr.mxu0 0.0
    %725 = vmatpush1.msra.mxu0 0.0
    %726 = vmatprep.subr.mxu0 0.0
    %727 = vmatpush1.msra.mxu0 0.0
    %728 = vmatprep.subr.mxu0 0.0
    %729 = vmatpush1.msra.mxu0 0.0
    %730 = vmatprep.subr.mxu0 0.0
    %731 = vmatpush1.msra.mxu0 0.0
    %732 = vmatprep.subr.mxu0 0.0
    %733 = vmatpush1.msra.mxu0 0.0
    %734 = vmatprep.subr.mxu0 0.0
    %735 = vmatpush1.msra.mxu0 0.0
    %736 = vmatprep.subr.mxu0 0.0
    %737 = vmatpush1.msra.mxu0 0.0
    %738 = vmatprep.subr.mxu0 0.0
    %739 = vmatpush1.msra.mxu0 0.0
    %740 = vmatprep.subr.mxu0 0.0
    %741 = vmatpush1.msra.mxu0 0.0
    %742 = vmatprep.subr.mxu0 0.0
    %743 = vmatpush1.msra.mxu0 0.0
    %744 = vmatprep.subr.mxu0 0.0
    %745 = vmatpush1.msra.mxu0 0.0
    %746 = vmatprep.subr.mxu0 0.0
    %747 = vmatpush1.msra.mxu0 0.0
    %748 = vmatprep.subr.mxu0 0.0
    %749 = vmatpush1.msra.mxu0 0.0
    %750 = vmatprep.subr.mxu0 0.0
    %751 = vmatpush1.msra.mxu0 0.0
    %752 = vmatprep.subr.mxu0 0.0
    %753 = vmatpush1.msra.mxu0 0.0
    %754 = vmatprep.subr.mxu0 0.0
    %755 = vmatpush1.msra.mxu0 0.0
    %756 = vmatprep.subr.mxu0 0.0
    %757 = vmatpush1.msra.mxu0 0.0
    %758 = vmatprep.subr.mxu0 0.0
    %759 = vmatpush1.msra.mxu0 0.0
    %760 = vmatprep.subr.mxu0 0.0
    %761 = vmatpush1.msra.mxu0 0.0
    %762 = vmatprep.subr.mxu0 0.0
    %763 = vmatpush1.msra.mxu0 0.0
    %764 = vmatprep.subr.mxu0 0.0
    %765 = vmatpush1.msra.mxu0 0.0
    %766 = vmatprep.subr.mxu0 0.0
    %767 = vmatpush1.msra.mxu0 0.0
    %768 = vmatprep.subr.mxu0 0.0
    %769 = vmatpush1.msra.mxu0 0.0
    %770 = vmatprep.subr.mxu0 0.0
    %771 = vmatpush1.msra.mxu0 0.0
    %772 = vmatprep.subr.mxu0 0.0
    %773 = vmatpush1.msra.mxu0 0.0
    %774 = vmatprep.mubr.f32.mxu0 0.0
    %775 = vmatmul.mubr.f32.gmra.mrb[0].mxu0 %v708
    %v776 = vpop.f32.mrb[0].mxu0
    %v777 = vadd.f32 %v706, %v776
    %v778 = vpop.f32.mrb[0].mxu0
    %779 = vdwg.mxu0
    %781 = vrot.lane.b32.xlu0 %v777, 96
    %v782 = vpop.permute.xlu0 %781
    %v783 = vsel %vm144, %v777, 0
    %v785 = vsel %vm144, %v782, 0
    %787 = vmatprep.subr.mxu0 0.0
    %788 = vmatpush1.xpose.msra.mxu0 %v785
    %789 = vmatprep.subr.mxu0 0.0
    %790 = vmatpush1.xpose.msra.mxu0 0.0
    %791 = vmatprep.subr.mxu0 0.0
    %792 = vmatpush1.xpose.msra.mxu0 0.0
    %793 = vmatprep.subr.mxu0 0.0
    %794 = vmatpush1.xpose.msra.mxu0 0.0
    %795 = vmatprep.subr.mxu0 0.0
    %796 = vmatpush1.xpose.msra.mxu0 0.0
    %797 = vmatprep.subr.mxu0 0.0
    %798 = vmatpush1.xpose.msra.mxu0 0.0
    %799 = vmatprep.subr.mxu0 0.0
    %800 = vmatpush1.xpose.msra.mxu0 0.0
    %801 = vmatprep.subr.mxu0 0.0
    %802 = vmatpush1.xpose.msra.mxu0 0.0
    %803 = vmatprep.subr.mxu0 0.0
    %804 = vmatpush1.xpose.msra.mxu0 0.0
    %805 = vmatprep.subr.mxu0 0.0
    %806 = vmatpush1.xpose.msra.mxu0 0.0
    %807 = vmatprep.subr.mxu0 0.0
    %808 = vmatpush1.xpose.msra.mxu0 0.0
    %809 = vmatprep.subr.mxu0 0.0
    %810 = vmatpush1.xpose.msra.mxu0 0.0
    %811 = vmatprep.subr.mxu0 0.0
    %812 = vmatpush1.xpose.msra.mxu0 0.0
    %813 = vmatprep.subr.mxu0 0.0
    %814 = vmatpush1.xpose.msra.mxu0 0.0
    %815 = vmatprep.subr.mxu0 0.0
    %816 = vmatpush1.xpose.msra.mxu0 0.0
    %817 = vmatprep.subr.mxu0 0.0
    %818 = vmatpush1.xpose.msra.mxu0 0.0
    %819 = vmatprep.subr.mxu0 0.0
    %820 = vmatpush1.xpose.msra.mxu0 0.0
    %821 = vmatprep.subr.mxu0 0.0
    %822 = vmatpush1.xpose.msra.mxu0 0.0
    %823 = vmatprep.subr.mxu0 0.0
    %824 = vmatpush1.xpose.msra.mxu0 0.0
    %825 = vmatprep.subr.mxu0 0.0
    %826 = vmatpush1.xpose.msra.mxu0 0.0
    %827 = vmatprep.subr.mxu0 0.0
    %828 = vmatpush1.xpose.msra.mxu0 0.0
    %829 = vmatprep.subr.mxu0 0.0
    %830 = vmatpush1.xpose.msra.mxu0 0.0
    %831 = vmatprep.subr.mxu0 0.0
    %832 = vmatpush1.xpose.msra.mxu0 0.0
    %833 = vmatprep.subr.mxu0 0.0
    %834 = vmatpush1.xpose.msra.mxu0 0.0
    %835 = vmatprep.subr.mxu0 0.0
    %836 = vmatpush1.xpose.msra.mxu0 0.0
    %837 = vmatprep.subr.mxu0 0.0
    %838 = vmatpush1.xpose.msra.mxu0 0.0
    %839 = vmatprep.subr.mxu0 0.0
    %840 = vmatpush1.xpose.msra.mxu0 0.0
    %841 = vmatprep.subr.mxu0 0.0
    %842 = vmatpush1.xpose.msra.mxu0 0.0
    %843 = vmatprep.subr.mxu0 0.0
    %844 = vmatpush1.xpose.msra.mxu0 0.0
    %845 = vmatprep.subr.mxu0 0.0
    %846 = vmatpush1.xpose.msra.mxu0 0.0
    %847 = vmatprep.subr.mxu0 0.0
    %848 = vmatpush1.xpose.msra.mxu0 0.0
    %849 = vmatprep.subr.mxu0 0.0
    %850 = vmatpush1.xpose.msra.mxu0 0.0
    %851 = vmatprep.mubr.f32.mxu0 0.0
    %852 = vmatmul.mubr.f32.gmra.mrb[0].mxu0 %v783
    %v853 = vpop.f32.mrb[0].mxu0
    %v854 = vadd.f32 0.0, %v853
    %v855 = vpop.f32.mrb[0].mxu0
    %856 = vdwg.mxu0
    %v857 = vsel %vm321, -1e+09, %v854
    %v858 = vsel %vm323, %v857, -inf
    %859 = vmax.xlane.f32.xlu0 %v858
    %v860 = vpop.xlane.xlu0 %859
    %v861 = vsub.f32 %v857, %v860
    %v862 = vmul.f32 %v861, 1.442695
    %v863 = vpow.pop %v862
    %v864 = vsel %vm323, %v863, 0.0
    %865 = vadd.xlane.f32.xlu0 %v864
    %v866 = vpop.xlane.xlu0 %865
    %v867 = vrcp.pop %v866
    %v868 = vmul.f32 %v863, %v867
    %869 = vrot.lane.b32.xlu0 %v777, 64
    %v870 = vpop.permute.xlu0 %869
    %v873 = vsel %vm323, %v868, 0
    %875 = vmatprep.subr.mxu0 0.0
    %876 = vmatpush1.msra.mxu0 %v870
    %877 = vmatprep.subr.mxu0 0.0
    %878 = vmatpush1.msra.mxu0 0.0
    %879 = vmatprep.subr.mxu0 0.0
    %880 = vmatpush1.msra.mxu0 0.0
    %881 = vmatprep.subr.mxu0 0.0
    %882 = vmatpush1.msra.mxu0 0.0
    %883 = vmatprep.subr.mxu0 0.0
    %884 = vmatpush1.msra.mxu0 0.0
    %885 = vmatprep.subr.mxu0 0.0
    %886 = vmatpush1.msra.mxu0 0.0
    %887 = vmatprep.subr.mxu0 0.0
    %888 = vmatpush1.msra.mxu0 0.0
    %889 = vmatprep.subr.mxu0 0.0
    %890 = vmatpush1.msra.mxu0 0.0
    %891 = vmatprep.subr.mxu0 0.0
    %892 = vmatpush1.msra.mxu0 0.0
    %893 = vmatprep.subr.mxu0 0.0
    %894 = vmatpush1.msra.mxu0 0.0
    %895 = vmatprep.subr.mxu0 0.0
    %896 = vmatpush1.msra.mxu0 0.0
    %897 = vmatprep.subr.mxu0 0.0
    %898 = vmatpush1.msra.mxu0 0.0
    %899 = vmatprep.subr.mxu0 0.0
    %900 = vmatpush1.msra.mxu0 0.0
    %901 = vmatprep.subr.mxu0 0.0
    %902 = vmatpush1.msra.mxu0 0.0
    %903 = vmatprep.subr.mxu0 0.0
    %904 = vmatpush1.msra.mxu0 0.0
    %905 = vmatprep.subr.mxu0 0.0
    %906 = vmatpush1.msra.mxu0 0.0
    %907 = vmatprep.subr.mxu0 0.0
    %908 = vmatpush1.msra.mxu0 0.0
    %909 = vmatprep.subr.mxu0 0.0
    %910 = vmatpush1.msra.mxu0 0.0
    %911 = vmatprep.subr.mxu0 0.0
    %912 = vmatpush1.msra.mxu0 0.0
    %913 = vmatprep.subr.mxu0 0.0
    %914 = vmatpush1.msra.mxu0 0.0
    %915 = vmatprep.subr.mxu0 0.0
    %916 = vmatpush1.msra.mxu0 0.0
    %917 = vmatprep.subr.mxu0 0.0
    %918 = vmatpush1.msra.mxu0 0.0
    %919 = vmatprep.subr.mxu0 0.0
    %920 = vmatpush1.msra.mxu0 0.0
    %921 = vmatprep.subr.mxu0 0.0
    %922 = vmatpush1.msra.mxu0 0.0
    %923 = vmatprep.subr.mxu0 0.0
    %924 = vmatpush1.msra.mxu0 0.0
    %925 = vmatprep.subr.mxu0 0.0
    %926 = vmatpush1.msra.mxu0 0.0
    %927 = vmatprep.subr.mxu0 0.0
    %928 = vmatpush1.msra.mxu0 0.0
    %929 = vmatprep.subr.mxu0 0.0
    %930 = vmatpush1.msra.mxu0 0.0
    %931 = vmatprep.subr.mxu0 0.0
    %932 = vmatpush1.msra.mxu0 0.0
    %933 = vmatprep.subr.mxu0 0.0
    %934 = vmatpush1.msra.mxu0 0.0
    %935 = vmatprep.subr.mxu0 0.0
    %936 = vmatpush1.msra.mxu0 0.0
    %937 = vmatprep.subr.mxu0 0.0
    %938 = vmatpush1.msra.mxu0 0.0
    %939 = vmatprep.mubr.f32.mxu0 0.0
    %940 = vmatmul.mubr.f32.gmra.mrb[0].mxu0 %v873
    %v941 = vpop.f32.mrb[0].mxu0
    %v942 = vadd.f32 %v699, %v941
    %v943 = vpop.f32.mrb[0].mxu0
    %944 = vdwg.mxu0
    %s945 = scalar_lea.vmem [#allocation2], 320
    %v946 = vld [vmem:[%s945] sm:$0xff]
    %v947 = vld [vmem:[%s945 + $0x8] sm:$0xff]
    %v948 = vld [vmem:[%s945 + $0x10] sm:$0xff]
    %v949 = vld [vmem:[%s945 + $0x18] sm:$0xff]
    %s950 = scalar_lea.vmem [#allocation5], 88
    %v951 = vld [vmem:[%s950] sm:$0xff]
    %v953 = vsel %vm144, %v942, 0
    %955 = vmatprep.subr.mxu0 0.0
    %956 = vmatpush1.msra.mxu0 %v946
    %957 = vmatprep.subr.mxu0 0.0
    %958 = vmatpush1.msra.mxu0 %v947
    %959 = vmatprep.subr.mxu0 0.0
    %960 = vmatpush1.msra.mxu0 %v948
    %961 = vmatprep.subr.mxu0 0.0
    %962 = vmatpush1.msra.mxu0 %v949
    %963 = vmatprep.subr.mxu0 0.0
    %964 = vmatpush1.msra.mxu0 0.0
    %965 = vmatprep.subr.mxu0 0.0
    %966 = vmatpush1.msra.mxu0 0.0
    %967 = vmatprep.subr.mxu0 0.0
    %968 = vmatpush1.msra.mxu0 0.0
    %969 = vmatprep.subr.mxu0 0.0
    %970 = vmatpush1.msra.mxu0 0.0
    %971 = vmatprep.subr.mxu0 0.0
    %972 = vmatpush1.msra.mxu0 0.0
    %973 = vmatprep.subr.mxu0 0.0
    %974 = vmatpush1.msra.mxu0 0.0
    %975 = vmatprep.subr.mxu0 0.0
    %976 = vmatpush1.msra.mxu0 0.0
    %977 = vmatprep.subr.mxu0 0.0
    %978 = vmatpush1.msra.mxu0 0.0
    %979 = vmatprep.subr.mxu0 0.0
    %980 = vmatpush1.msra.mxu0 0.0
    %981 = vmatprep.subr.mxu0 0.0
    %982 = vmatpush1.msra.mxu0 0.0
    %983 = vmatprep.subr.mxu0 0.0
    %984 = vmatpush1.msra.mxu0 0.0
    %985 = vmatprep.subr.mxu0 0.0
    %986 = vmatpush1.msra.mxu0 0.0
    %987 = vmatprep.subr.mxu0 0.0
    %988 = vmatpush1.msra.mxu0 0.0
    %989 = vmatprep.subr.mxu0 0.0
    %990 = vmatpush1.msra.mxu0 0.0
    %991 = vmatprep.subr.mxu0 0.0
    %992 = vmatpush1.msra.mxu0 0.0
    %993 = vmatprep.subr.mxu0 0.0
    %994 = vmatpush1.msra.mxu0 0.0
    %995 = vmatprep.subr.mxu0 0.0
    %996 = vmatpush1.msra.mxu0 0.0
    %997 = vmatprep.subr.mxu0 0.0
    %998 = vmatpush1.msra.mxu0 0.0
    %999 = vmatprep.subr.mxu0 0.0
    %1000 = vmatpush1.msra.mxu0 0.0
    %1001 = vmatprep.subr.mxu0 0.0
    %1002 = vmatpush1.msra.mxu0 0.0
    %1003 = vmatprep.subr.mxu0 0.0
    %1004 = vmatpush1.msra.mxu0 0.0
    %1005 = vmatprep.subr.mxu0 0.0
    %1006 = vmatpush1.msra.mxu0 0.0
    %1007 = vmatprep.subr.mxu0 0.0
    %1008 = vmatpush1.msra.mxu0 0.0
    %1009 = vmatprep.subr.mxu0 0.0
    %1010 = vmatpush1.msra.mxu0 0.0
    %1011 = vmatprep.subr.mxu0 0.0
    %1012 = vmatpush1.msra.mxu0 0.0
    %1013 = vmatprep.subr.mxu0 0.0
    %1014 = vmatpush1.msra.mxu0 0.0
    %1015 = vmatprep.subr.mxu0 0.0
    %1016 = vmatpush1.msra.mxu0 0.0
    %1017 = vmatprep.subr.mxu0 0.0
    %1018 = vmatpush1.msra.mxu0 0.0
    %1019 = vmatprep.mubr.f32.mxu0 0.0
    %1020 = vmatmul.mubr.f32.gmra.mrb[0].mxu0 %v953
    %v1021 = vpop.f32.mrb[0].mxu0
    %v1022 = vadd.f32 %v951, %v1021
    %v1023 = vpop.f32.mrb[0].mxu0
    %1024 = vdwg.mxu0
    %v1025 = vadd.f32 %v1022, %v678
    %s1026 = scalar_lea.vmem [#allocation5], 96
    %v1027 = vld [vmem:[%s1026] sm:$0xff]
    %s1028 = scalar_lea.vmem [#allocation5], 104
    %v1029 = vld [vmem:[%s1028] sm:$0xff]
    %v1030 = vsel %vm144, %v1025, 0.0
    %1031 = vadd.xlane.f32.xlu0 %v1030
    %v1032 = vpop.xlane.xlu0 %1031
    %v1033 = vmul.f32 %v1032, %v148
    %v1034 = vmul.f32 %v1025, %v1025
    %v1035 = vsel %vm144, %v1034, 0.0
    %1036 = vadd.xlane.f32.xlu0 %v1035
    %v1037 = vpop.xlane.xlu0 %1036
    %v1038 = vmul.f32 %v1037, %v148
    %v1039 = vmul.f32 %v1033, %v1033
    %v1040 = vsub.f32 %v1038, %v1039
    %v1041 = vsub.f32 %v1025, %v1033
    %v1042 = vadd.f32 %v1040, 1e-05
    %v1043 = vrsqrt.pop %v1042
    %v1044 = vmul.f32 %v1041, %v1043
    %v1045 = vmul.f32 %v1044, %v1027
    %v1046 = vadd.f32 %v1045, %v1029
    %s1047 = scalar_lea.vmem [#allocation2], 384
    %v1048 = vld [vmem:[%s1047] sm:$0xff]
    %v1049 = vld [vmem:[%s1047 + $0x8] sm:$0xff]
    %v1050 = vld [vmem:[%s1047 + $0x10] sm:$0xff]
    %v1051 = vld [vmem:[%s1047 + $0x18] sm:$0xff]
    %s1052 = scalar_lea.vmem [#allocation5], 112
    %v1053 = vld [vmem:[%s1052] sm:$0xff]
    %v1055 = vsel %vm144, %v1046, 0
    %1057 = vmatprep.subr.mxu0 0.0
    %1058 = vmatpush1.msra.mxu0 %v1048
    %1059 = vmatprep.subr.mxu0 0.0
    %1060 = vmatpush1.msra.mxu0 %v1049
    %1061 = vmatprep.subr.mxu0 0.0
    %1062 = vmatpush1.msra.mxu0 %v1050
    %1063 = vmatprep.subr.mxu0 0.0
    %1064 = vmatpush1.msra.mxu0 %v1051
    %1065 = vmatprep.subr.mxu0 0.0
    %1066 = vmatpush1.msra.mxu0 0.0
    %1067 = vmatprep.subr.mxu0 0.0
    %1068 = vmatpush1.msra.mxu0 0.0
    %1069 = vmatprep.subr.mxu0 0.0
    %1070 = vmatpush1.msra.mxu0 0.0
    %1071 = vmatprep.subr.mxu0 0.0
    %1072 = vmatpush1.msra.mxu0 0.0
    %1073 = vmatprep.subr.mxu0 0.0
    %1074 = vmatpush1.msra.mxu0 0.0
    %1075 = vmatprep.subr.mxu0 0.0
    %1076 = vmatpush1.msra.mxu0 0.0
    %1077 = vmatprep.subr.mxu0 0.0
    %1078 = vmatpush1.msra.mxu0 0.0
    %1079 = vmatprep.subr.mxu0 0.0
    %1080 = vmatpush1.msra.mxu0 0.0
    %1081 = vmatprep.subr.mxu0 0.0
    %1082 = vmatpush1.msra.mxu0 0.0
    %1083 = vmatprep.subr.mxu0 0.0
    %1084 = vmatpush1.msra.mxu0 0.0
    %1085 = vmatprep.subr.mxu0 0.0
    %1086 = vmatpush1.msra.mxu0 0.0
    %1087 = vmatprep.subr.mxu0 0.0
    %1088 = vmatpush1.msra.mxu0 0.0
    %1089 = vmatprep.subr.mxu0 0.0
    %1090 = vmatpush1.msra.mxu0 0.0
    %1091 = vmatprep.subr.mxu0 0.0
    %1092 = vmatpush1.msra.mxu0 0.0
    %1093 = vmatprep.subr.mxu0 0.0
    %1094 = vmatpush1.msra.mxu0 0.0
    %1095 = vmatprep.subr.mxu0 0.0
    %1096 = vmatpush1.msra.mxu0 0.0
    %1097 = vmatprep.subr.mxu0 0.0
    %1098 = vmatpush1.msra.mxu0 0.0
    %1099 = vmatprep.subr.mxu0 0.0
    %1100 = vmatpush1.msra.mxu0 0.0
    %1101 = vmatprep.subr.mxu0 0.0
    %1102 = vmatpush1.msra.mxu0 0.0
    %1103 = vmatprep.subr.mxu0 0.0
    %1104 = vmatpush1.msra.mxu0 0.0
    %1105 = vmatprep.subr.mxu0 0.0
    %1106 = vmatpush1.msra.mxu0 0.0
    %1107 = vmatprep.subr.mxu0 0.0
    %1108 = vmatpush1.msra.mxu0 0.0
    %1109 = vmatprep.subr.mxu0 0.0
    %1110 = vmatpush1.msra.mxu0 0.0
    %1111 = vmatprep.subr.mxu0 0.0
    %1112 = vmatpush1.msra.mxu0 0.0
    %1113 = vmatprep.subr.mxu0 0.0
    %1114 = vmatpush1.msra.mxu0 0.0
    %1115 = vmatprep.subr.mxu0 0.0
    %1116 = vmatpush1.msra.mxu0 0.0
    %1117 = vmatprep.subr.mxu0 0.0
    %1118 = vmatpush1.msra.mxu0 0.0
    %1119 = vmatprep.subr.mxu0 0.0
    %1120 = vmatpush1.msra.mxu0 0.0
    %1121 = vmatprep.mubr.f32.mxu0 0.0
    %1122 = vmatmul.mubr.f32.gmra.mrb[0].mxu0 %v1055
    %v1123 = vpop.f32.mrb[0].mxu0
    %v1124 = vadd.f32 %v1053, %v1123
    %v1125 = vpop.f32.mrb[0].mxu0
    %1126 = vdwg.mxu0
    %v1127 = vmax.f32 %v1124, 0.0
    %s1128 = scalar_lea.vmem [#allocation2], 448
    %v1129 = vld [vmem:[%s1128] sm:$0xff]
    %v1130 = vld [vmem:[%s1128 + $0x8] sm:$0xff]
    %v1131 = vld [vmem:[%s1128 + $0x10] sm:$0xff]
    %v1132 = vld [vmem:[%s1128 + $0x18] sm:$0xff]
    %v1133 = vld [vmem:[%s1128 + $0x20] sm:$0xff]
    %v1134 = vld [vmem:[%s1128 + $0x28] sm:$0xff]
    %v1135 = vld [vmem:[%s1128 + $0x30] sm:$0xff]
    %v1136 = vld [vmem:[%s1128 + $0x38] sm:$0xff]
    %s1137 = scalar_lea.vmem [#allocation5], 120
    %v1138 = vld [vmem:[%s1137] sm:$0xff]
    %v1140 = vsel %vm67, %v1127, 0
    %1142 = vmatprep.subr.mxu0 0.0
    %1143 = vmatpush1.msra.mxu0 %v1129
    %1144 = vmatprep.subr.mxu0 0.0
    %1145 = vmatpush1.msra.mxu0 %v1130
    %1146 = vmatprep.subr.mxu0 0.0
    %1147 = vmatpush1.msra.mxu0 %v1131
    %1148 = vmatprep.subr.mxu0 0.0
    %1149 = vmatpush1.msra.mxu0 %v1132
    %1150 = vmatprep.subr.mxu0 0.0
    %1151 = vmatpush1.msra.mxu0 %v1133
    %1152 = vmatprep.subr.mxu0 0.0
    %1153 = vmatpush1.msra.mxu0 %v1134
    %1154 = vmatprep.subr.mxu0 0.0
    %1155 = vmatpush1.msra.mxu0 %v1135
    %1156 = vmatprep.subr.mxu0 0.0
    %1157 = vmatpush1.msra.mxu0 %v1136
    %1158 = vmatprep.subr.mxu0 0.0
    %1159 = vmatpush1.msra.mxu0 0.0
    %1160 = vmatprep.subr.mxu0 0.0
    %1161 = vmatpush1.msra.mxu0 0.0
    %1162 = vmatprep.subr.mxu0 0.0
    %1163 = vmatpush1.msra.mxu0 0.0
    %1164 = vmatprep.subr.mxu0 0.0
    %1165 = vmatpush1.msra.mxu0 0.0
    %1166 = vmatprep.subr.mxu0 0.0
    %1167 = vmatpush1.msra.mxu0 0.0
    %1168 = vmatprep.subr.mxu0 0.0
    %1169 = vmatpush1.msra.mxu0 0.0
    %1170 = vmatprep.subr.mxu0 0.0
    %1171 = vmatpush1.msra.mxu0 0.0
    %1172 = vmatprep.subr.mxu0 0.0
    %1173 = vmatpush1.msra.mxu0 0.0
    %1174 = vmatprep.subr.mxu0 0.0
    %1175 = vmatpush1.msra.mxu0 0.0
    %1176 = vmatprep.subr.mxu0 0.0
    %1177 = vmatpush1.msra.mxu0 0.0
    %1178 = vmatprep.subr.mxu0 0.0
    %1179 = vmatpush1.msra.mxu0 0.0
    %1180 = vmatprep.subr.mxu0 0.0
    %1181 = vmatpush1.msra.mxu0 0.0
    %1182 = vmatprep.subr.mxu0 0.0
    %1183 = vmatpush1.msra.mxu0 0.0
    %1184 = vmatprep.subr.mxu0 0.0
    %1185 = vmatpush1.msra.mxu0 0.0
    %1186 = vmatprep.subr.mxu0 0.0
    %1187 = vmatpush1.msra.mxu0 0.0
    %1188 = vmatprep.subr.mxu0 0.0
    %1189 = vmatpush1.msra.mxu0 0.0
    %1190 = vmatprep.subr.mxu0 0.0
    %1191 = vmatpush1.msra.mxu0 0.0
    %1192 = vmatprep.subr.mxu0 0.0
    %1193 = vmatpush1.msra.mxu0 0.0
    %1194 = vmatprep.subr.mxu0 0.0
    %1195 = vmatpush1.msra.mxu0 0.0
    %1196 = vmatprep.subr.mxu0 0.0
    %1197 = vmatpush1.msra.mxu0 0.0
    %1198 = vmatprep.subr.mxu0 0.0
    %1199 = vmatpush1.msra.mxu0 0.0
    %1200 = vmatprep.subr.mxu0 0.0
    %1201 = vmatpush1.msra.mxu0 0.0
    %1202 = vmatprep.subr.mxu0 0.0
    %1203 = vmatpush1.msra.mxu0 0.0
    %1204 = vmatprep.subr.mxu0 0.0
    %1205 = vmatpush1.msra.mxu0 0.0
    %1206 = vmatprep.mubr.f32.mxu0 0.0
    %1207 = vmatmul.mubr.f32.gmra.mrb[0].mxu0 %v1140
    %v1208 = vpop.f32.mrb[0].mxu0
    %v1209 = vadd.f32 %v1138, %v1208
    %v1210 = vpop.f32.mrb[0].mxu0
    %1211 = vdwg.mxu0
    %v1212 = vadd.f32 %v1209, %v1025
    %s1213 = scalar_lea.vmem [#allocation5], 128
    %v1214 = vld [vmem:[%s1213] sm:$0xff]
    %s1215 = scalar_lea.vmem [#allocation5], 136
    %v1216 = vld [vmem:[%s1215] sm:$0xff]
    %v1217 = vsel %vm144, %v1212, 0.0
    %1218 = vadd.xlane.f32.xlu0 %v1217
    %v1219 = vpop.xlane.xlu0 %1218
    %v1220 = vmul.f32 %v1219, %v148
    %v1221 = vmul.f32 %v1212, %v1212
    %v1222 = vsel %vm144, %v1221, 0.0
    %1223 = vadd.xlane.f32.xlu0 %v1222
    %v1224 = vpop.xlane.xlu0 %1223
    %v1225 = vmul.f32 %v1224, %v148
    %v1226 = vmul.f32 %v1220, %v1220
    %v1227 = vsub.f32 %v1225, %v1226
    %v1228 = vsub.f32 %v1212, %v1220
    %v1229 = vadd.f32 %v1227, 1e-05
    %v1230 = vrsqrt.pop %v1229
    %v1231 = vmul.f32 %v1228, %v1230
    %v1232 = vmul.f32 %v1231, %v1214
    %v1233 = vadd.f32 %v1232, %v1216
    %s1234 = scalar_lea.vmem [#allocation2], 512
    %v1235 = vld [vmem:[%s1234] sm:$0xff]
    %v1236 = vld [vmem:[%s1234 + $0x8] sm:$0xff]
    %v1237 = vld [vmem:[%s1234 + $0x10] sm:$0xff]
    %v1238 = vld [vmem:[%s1234 + $0x18] sm:$0xff]
    %s1239 = scalar_lea.vmem [#allocation5], 144
    %v1240 = vld [vmem:[%s1239] sm:$0xff]
    %v1242 = vsel %vm144, %v1233, 0
    %1244 = vmatprep.subr.mxu0 0.0
    %1245 = vmatpush1.msra.mxu0 %v1235
    %1246 = vmatprep.subr.mxu0 0.0
    %1247 = vmatpush1.msra.mxu0 %v1236
    %1248 = vmatprep.subr.mxu0 0.0
    %1249 = vmatpush1.msra.mxu0 %v1237
    %1250 = vmatprep.subr.mxu0 0.0
    %1251 = vmatpush1.msra.mxu0 %v1238
    %1252 = vmatprep.subr.mxu0 0.0
    %1253 = vmatpush1.msra.mxu0 0.0
    %1254 = vmatprep.subr.mxu0 0.0
    %1255 = vmatpush1.msra.mxu0 0.0
    %1256 = vmatprep.subr.mxu0 0.0
    %1257 = vmatpush1.msra.mxu0 0.0
    %1258 = vmatprep.subr.mxu0 0.0
    %1259 = vmatpush1.msra.mxu0 0.0
    %1260 = vmatprep.subr.mxu0 0.0
    %1261 = vmatpush1.msra.mxu0 0.0
    %1262 = vmatprep.subr.mxu0 0.0
    %1263 = vmatpush1.msra.mxu0 0.0
    %1264 = vmatprep.subr.mxu0 0.0
    %1265 = vmatpush1.msra.mxu0 0.0
    %1266 = vmatprep.subr.mxu0 0.0
    %1267 = vmatpush1.msra.mxu0 0.0
    %1268 = vmatprep.subr.mxu0 0.0
    %1269 = vmatpush1.msra.mxu0 0.0
    %1270 = vmatprep.subr.mxu0 0.0
    %1271 = vmatpush1.msra.mxu0 0.0
    %1272 = vmatprep.subr.mxu0 0.0
    %1273 = vmatpush1.msra.mxu0 0.0
    %1274 = vmatprep.subr.mxu0 0.0
    %1275 = vmatpush1.msra.mxu0 0.0
    %1276 = vmatprep.subr.mxu0 0.0
    %1277 = vmatpush1.msra.mxu0 0.0
    %1278 = vmatprep.subr.mxu0 0.0
    %1279 = vmatpush1.msra.mxu0 0.0
    %1280 = vmatprep.subr.mxu0 0.0
    %1281 = vmatpush1.msra.mxu0 0.0
    %1282 = vmatprep.subr.mxu0 0.0
    %1283 = vmatpush1.msra.mxu0 0.0
    %1284 = vmatprep.subr.mxu0 0.0
    %1285 = vmatpush1.msra.mxu0 0.0
    %1286 = vmatprep.subr.mxu0 0.0
    %1287 = vmatpush1.msra.mxu0 0.0
    %1288 = vmatprep.subr.mxu0 0.0
    %1289 = vmatpush1.msra.mxu0 0.0
    %1290 = vmatprep.subr.mxu0 0.0
    %1291 = vmatpush1.msra.mxu0 0.0
    %1292 = vmatprep.subr.mxu0 0.0
    %1293 = vmatpush1.msra.mxu0 0.0
    %1294 = vmatprep.subr.mxu0 0.0
    %1295 = vmatpush1.msra.mxu0 0.0
    %1296 = vmatprep.subr.mxu0 0.0
    %1297 = vmatpush1.msra.mxu0 0.0
    %1298 = vmatprep.subr.mxu0 0.0
    %1299 = vmatpush1.msra.mxu0 0.0
    %1300 = vmatprep.subr.mxu0 0.0
    %1301 = vmatpush1.msra.mxu0 0.0
    %1302 = vmatprep.subr.mxu0 0.0
    %1303 = vmatpush1.msra.mxu0 0.0
    %1304 = vmatprep.subr.mxu0 0.0
    %1305 = vmatpush1.msra.mxu0 0.0
    %1306 = vmatprep.subr.mxu0 0.0
    %1307 = vmatpush1.msra.mxu0 0.0
    %1308 = vmatprep.mubr.f32.mxu0 0.0
    %1309 = vmatmul.mubr.f32.gmra.mrb[0].mxu0 %v1242
    %v1310 = vpop.f32.mrb[0].mxu0
    %v1311 = vadd.f32 %v1240, %v1310
    %v1312 = vpop.f32.mrb[0].mxu0
    %1313 = vdwg.mxu0
    %1314 = vmax.xlane.f32.xlu0 %v1311
    %v1315 = vpop.xlane.xlu0 %1314
    %v1316 = vsub.f32 %v1311, %v1315
    %v1317 = vmul.f32 %v1316, 1.442695
    %v1318 = vpow.pop %v1317
    %1319 = vadd.xlane.f32.xlu0 %v1318
    %v1320 = vpop.xlane.xlu0 %1319
    %v1321 = vrcp.pop %v1320
    %v1322 = vmul.f32 %v1318, %v1321
    %1323 = vst [vmem:[#allocation7] sm:$0xff] %v1322
    // Predicated region
    $region30: #{nanogpt_forward.1} parent=1 // pred_check
      _
    $region31: #{nanogpt_forward.1} parent=1 // pred_check_branch
      %1325 = sbr.rel (0) target = $region33
    $region32: #{nanogpt_forward.1} parent=1 // pred_region
      %s1327 = ssub.s32 128, 128
      %1328 = vsyncadd [#allocation4], %s1327
      %s1330 = sshll.u32 [#allocation7], 4
      %s1331 = int_to_ptr.vmem [resolvable:$true] %s1330
      %1333 = dma.vmem_to_hbm [thread:$0]  %s1331, 128, %s5, [#allocation4]
    $region33: #{nanogpt_forward.1} parent=1 // pred_fallthru
      _
    // Predicated region
    $region34: #{nanogpt_forward.1} parent=1 // pred_check
      _
    $region35: #{nanogpt_forward.1} parent=1 // pred_check_branch
      %1335 = sbr.rel (0) target = $region37
    $region36: #{nanogpt_forward.1} parent=1 // pred_region
      %1336 = dma.done [#allocation4], 128
    $region37: #{nanogpt_forward.1} parent=1 // pred_fallthru
      _
    %1337 = vsyncpa [#allocation3], 1
    %1338 = vsyncpa [#allocation6], 1
    %1339 = vsyncpa [#allocation4], 1

</llo_original>
